<compile_context>
chip_gen: v7x
topology: tpu7x:2x2x1
jax: 0.10.0
libtpu: 0.0.40
codegen_flags: <defaults>
</compile_context>

<pallas_src>
import functools

import jax
import jax.numpy as jnp
from jax import lax
from jax.experimental import pallas as pl
from jax.experimental.pallas import tpu as pltpu


def _round_up(a, b):
    return (a + b - 1) // b * b


def _cdiv(a, b):
    return (a + b - 1) // b


# ------------------------------------------------------------------ kernel ----
def _vq_kernel(x_ref, cb_ref, chsq_ref,
               q_ref, idx_ref, dw_ref, cnt_ref, sse_ref):
    i = pl.program_id(1)   # inner (reduction-carried) tile axis

    # Per-core accumulator blocks (constant index across the inner axis).
    @pl.when(i == 0)
    def _init():
        dw_ref[...] = jnp.zeros_like(dw_ref)
        cnt_ref[...] = jnp.zeros_like(cnt_ref)
        sse_ref[...] = jnp.zeros_like(sse_ref)

    x = x_ref[...].astype(jnp.float32)      # (TB, D) streamed in native dtype
    cb = cb_ref[...]                        # (N, D)  f32 resident codebook
    half_csq = chsq_ref[...]                # (1, N)  f32 resident 0.5*||c||^2
    TB = x.shape[0]
    N = cb.shape[0]

    # argmin_n ||x - c_n||^2 == argmin_n (0.5*||c_n||^2 - x.c_n)
    # (per-row ||x||^2 dropped and 2.0 scale folded into the hoisted term; both
    #  are argmin-invariant, see correctness note on near-tie rounding).
    xc = lax.dot_general(x, cb, (((1,), (1,)), ((), ())),
                         preferred_element_type=jnp.float32)          # (TB, N) MXU
    d2 = half_csq - xc

    # first-index-on-ties argmin, like torch.argmin
    min_d = jnp.min(d2, axis=1, keepdims=True)
    iota_n = lax.broadcasted_iota(jnp.int32, (TB, N), 1)
    idx_col = jnp.min(jnp.where(d2 <= min_d, iota_n, N),
                      axis=1, keepdims=True)                          # (TB, 1)

    enc = (iota_n == idx_col).astype(jnp.float32)                     # one-hot (TB, N)
    quant = jnp.dot(enc, cb, preferred_element_type=jnp.float32)      # (TB, D) MXU
    q_ref[...] = quant.astype(q_ref.dtype)

    # Lane-dense index row: iota(1,N) contracted with enc over N -> (1, TB).
    # Exact (single non-zero term per column, values < 2^24); lands directly in
    # lane-major layout, avoiding an XLU transpose and masked column stores.
    iota_row = lax.broadcasted_iota(jnp.int32, (1, N), 1).astype(jnp.float32)
    idx_row = lax.dot_general(iota_row, enc, (((1,), (1,)), ((), ())),
                              preferred_element_type=jnp.float32)     # (1, TB)
    idx_ref[...] = idx_row.astype(jnp.int32)[None]                    # (1, 1, TB)

    # Streaming statistics.  Padded rows are all-zero: they contribute nothing
    # to dw; count / SSE contributions are corrected once in the glue.
    diff = quant - x
    dsq = jnp.sum(diff * diff, axis=1, keepdims=True)                 # (TB, 1)

    dw_ref[...] += lax.dot_general(enc, x, (((0,), (0,)), ((), ())),
                                   preferred_element_type=jnp.float32)[None]  # (1,N,D)
    cnt_ref[...] += jnp.sum(enc, axis=0, keepdims=True)[None]                 # (1,1,N)
    sse_ref[...] += jnp.sum(dsq, axis=0, keepdims=True)[None]                 # (1,1,1)


# ------------------------------------------------------------------ tiling ----
def _choose_tb(Bf, tile_rows):
    """Row-tile size: multiple of 128 (lane-dense idx), divisor of Bf if possible."""
    cap = max(128, (tile_rows // 128) * 128)
    if Bf >= 256:
        # Keep at least two tiles so v7x can split rows across both TCs.
        cap = min(cap, max(128, (Bf // 2 // 128) * 128))
    if Bf % 128 == 0:
        for tb in range(cap, 0, -128):
            if Bf % tb == 0:
                return tb
    return min(cap, _round_up(Bf, 128))


# ----------------------------------------------------------------- wrapper ----
def vq_quantize_pallas(flat_x, codebook, *, tile_rows=1024):
    """Returns (quantized, encoding_indices(Bf,1), enc^T@x, enc.sum(0), sum((q-x)^2))."""
    Bf, D = flat_x.shape
    cb32 = codebook.astype(jnp.float32)
    N = cb32.shape[0]

    TB = _choose_tb(Bf, tile_rows)
    total_tiles = _cdiv(Bf, TB)
    num_cores = 2 if total_tiles >= 2 else 1       # v7x dual-TC split; free elsewhere
    total_tiles = _round_up(total_tiles, num_cores)
    tiles_per_core = total_tiles // num_cores
    Bf_pad = total_tiles * TB
    n_pad = Bf_pad - Bf

    x_pad = jnp.pad(flat_x, ((0, n_pad), (0, 0))) if n_pad else flat_x
    half_csq = 0.5 * jnp.sum(cb32 * cb32, axis=1)[None, :]            # (1, N), hoisted

    out_shape = (
        jax.ShapeDtypeStruct((Bf_pad, D), flat_x.dtype),              # quantized (native)
        jax.ShapeDtypeStruct((total_tiles, 1, TB), jnp.int32),        # lane-dense indices
        jax.ShapeDtypeStruct((num_cores, N, D), jnp.float32),         # enc^T @ x partials
        jax.ShapeDtypeStruct((num_cores, 1, N), jnp.float32),         # enc.sum(0) partials
        jax.ShapeDtypeStruct((num_cores, 1, 1), jnp.float32),         # SSE partials
    )
    grid_spec = pltpu.PrefetchScalarGridSpec(
        num_scalar_prefetch=0,
        grid=(num_cores, tiles_per_core),
        in_specs=[
            pl.BlockSpec((TB, D), lambda c, i: (c * tiles_per_core + i, 0)),  # x tile
            pl.BlockSpec((N, D), lambda c, i: (0, 0)),                        # codebook
            pl.BlockSpec((1, N), lambda c, i: (0, 0)),                        # 0.5*||c||^2
        ],
        out_specs=[
            pl.BlockSpec((TB, D), lambda c, i: (c * tiles_per_core + i, 0)),
            pl.BlockSpec((1, 1, TB), lambda c, i: (c * tiles_per_core + i, 0, 0)),
            pl.BlockSpec((1, N, D), lambda c, i: (c, 0, 0)),    # per-core accumulators:
            pl.BlockSpec((1, 1, N), lambda c, i: (c, 0, 0)),    # block index constant
            pl.BlockSpec((1, 1, 1), lambda c, i: (c, 0, 0)),    # across the inner axis
        ],
    )
    quant, idx_rows, dw_p, cnt_p, sse_p = pl.pallas_call(
        _vq_kernel,
        out_shape=out_shape,
        grid_spec=grid_spec,
        compiler_params=pltpu.CompilerParams(
            dimension_semantics=("parallel", "arbitrary"),
            vmem_limit_bytes=48 * 1024 * 1024),   # safe on v7x (64 MiB), ample headroom
    )(x_pad, cb32, half_csq)

    # Combine the (at most 2) per-core partials in glue: negligible (N,D) adds.
    dw = jnp.sum(dw_p, axis=0)                    # (N, D)
    cnt = jnp.sum(cnt_p, axis=0)[0]               # (N,)
    sse = jnp.sum(sse_p)                          # scalar

    if n_pad:
        # Padded rows are zero vectors: dw is untouched; each padded row selects
        # the first code of minimal norm and adds ||c_j0||^2 to SSE. Correct once.
        csq = 2.0 * half_csq[0]
        j0 = jnp.argmin(csq)                      # first-on-ties, same as the kernel
        cnt = cnt.at[j0].add(-float(n_pad))
        sse = sse - float(n_pad) * csq[j0]
        quant = quant[:Bf]

    idx = idx_rows.reshape(-1)[:Bf][:, None]      # (Bf, 1) int32
    return quant, idx, dw, cnt, sse


# ---------------------------------------------------- VectorQuantizer.forward -
def vector_quantizer_forward(x, state, config):
    """Functional equivalent of VectorQuantizer.forward in training mode.

    state = dict(codebook, codebook_ema, cluster_size_ema).
    Returns (quantized, result_dict, new_state).
    """
    x_shape = x.shape
    flat_x = x.reshape(-1, x_shape[-1])           # native dtype; kernel upcasts
    Bf, D = flat_x.shape
    N = config["codebook_size"]

    # TODO(synk): config.vqvae.l2_normalize=False path only; the l2-normalized
    # branch (einsum + argmax) and the randomized k-means codebook init
    # (_kpoints/kmeans + torch.distributed collectives) are alternate/stateful
    # paths not exercised here (kmeans_initialized=True).
    (quantized_flat, encoding_indices, dw, cluster_counts,
     sse) = vq_quantize_pallas(flat_x, state["codebook"])

    quantized = quantized_flat.reshape(x_shape).astype(x.dtype)

    # One-hot encodings rebuilt lazily in glue (the kernel never writes the
    # (Bf, N) one-hot to HBM; only its reductions dw / counts are produced).
    encodings = jax.nn.one_hot(encoding_indices[:, 0], N, dtype=x.dtype)

    mse = sse / float(Bf * D)                     # global mean((quantized - x)^2)
    commitment_cost = config["commitment_cost"]
    # TODO(synk): e/q latent losses share one forward scalar; the reference's
    # stop_gradient split (detach quantized vs detach x) only changes backward,
    # which would need a custom VJP around the Pallas call.
    e_latent_loss = mse * commitment_cost
    q_latent_loss = mse
    # TODO(synk): entropy_loss branch is shadowed/broken in the reference
    # (local `entropy_loss = 0.0` shadows the function); ratio treated as 0.
    ent_loss = jnp.float32(0.0)
    loss = e_latent_loss + q_latent_loss + ent_loss

    # EMA updates (matches ExponentialMovingAverage.update)
    decay = config["ema_decay"]
    eps = config["eps"]
    new_cluster_size_ema = (decay * state["cluster_size_ema"]
                            + (1.0 - decay) * cluster_counts)
    # Reference computes flat_x.T @ encodings (D, N) but codebook_ema is (N, D);
    # the intended update uses the transpose (encodings.T @ flat_x) == dw.
    new_codebook_ema = decay * state["codebook_ema"] + (1.0 - decay) * dw

    n = jnp.sum(new_cluster_size_ema)
    smoothed = (new_cluster_size_ema + eps) / (n + N * eps) * n
    new_codebook = new_codebook_ema / smoothed[:, None]

    # straight-through estimator: forward == quantized, gradient passes to x
    quantized_st = x + lax.stop_gradient(quantized - x)

    avg_probs = cluster_counts / float(Bf)
    perplexity = jnp.exp(-jnp.sum(avg_probs * jnp.log(avg_probs + 1e-10)))

    result_dict = {
        "quantizer_loss": loss,
        "e_latent_loss": e_latent_loss,
        "q_latent_loss": q_latent_loss,
        "entropy_loss": ent_loss,
        "encodings": encodings,
        "encoding_indices": encoding_indices,
        "raw": x,
        "perplexity": perplexity,
    }
    new_state = {
        "codebook": new_codebook,
        "codebook_ema": new_codebook_ema,
        "cluster_size_ema": new_cluster_size_ema,
    }
    return quantized_st, result_dict, new_state


# -------------------------------------------------------------------- main ----
if __name__ == "__main__":
    # config (config.vqvae.*)
    config = dict(
        codebook_size=128,
        embed_dim=32,
        commitment_cost=0.25,
        ema_decay=0.99,
        eps=1e-5,
        l2_normalize=False,
        entropy_loss_ratio=0.0,
    )

    key = jax.random.PRNGKey(0)
    kx, kc = jax.random.split(key)

    B, H, W, D = 2, 8, 8, config["embed_dim"]
    N = config["codebook_size"]

    # kaiming_uniform_(mode='fan_in', nonlinearity='relu') on (N, D): fan_in = D
    bound = jnp.sqrt(6.0 / D)
    codebook = jax.random.uniform(kc, (N, D), jnp.float32, -bound, bound)
    state = {
        "codebook": codebook,
        "codebook_ema": codebook,
        "cluster_size_ema": jnp.zeros((N,), jnp.float32),
    }

    x = jax.random.normal(kx, (B, H, W, D), jnp.float32)

    fwd = jax.jit(functools.partial(vector_quantizer_forward, config=config))
    quantized, result_dict, new_state = fwd(x, state)
    jax.block_until_ready((quantized, result_dict, new_state))

    assert quantized.shape == x.shape
    assert result_dict["encodings"].shape == (B * H * W, N)
    assert result_dict["encoding_indices"].shape == (B * H * W, 1)
    assert new_state["codebook"].shape == (N, D)
    print("KERNEL_OK")
</pallas_src>

<mosaic_0001>
module attributes {stable_mosaic.version = 11 : i64} {
  func.func @_vq_kernel(%arg0: i32, %arg1: i32, %arg2: memref<128x32xf32, #tpu.memory_space<vmem>>, %arg3: memref<128x32xf32, #tpu.memory_space<vmem>>, %arg4: memref<1x128xf32, #tpu.memory_space<vmem>>, %arg5: memref<128x32xf32, #tpu.memory_space<vmem>>, %arg6: memref<1x1x128xi32, #tpu.memory_space<vmem>>, %arg7: memref<1x128x32xf32, #tpu.memory_space<vmem>>, %arg8: memref<1x1x128xf32, #tpu.memory_space<vmem>>, %arg9: memref<1x1x1xf32, #tpu.memory_space<vmem>>) attributes {dimension_semantics = [#tpu.dimension_semantics<parallel>, #tpu.dimension_semantics<arbitrary>], iteration_bounds = array<i64: 1, 1>, scalar_prefetch = 0 : i64, scratch_operands = 0 : i64, tpu.core_type = #tpu.core_type<tc>, window_params = [{transform_indices = @transform_0, window_bounds = array<i64: 128, 32>}, {pipeline_mode = #tpu.pipeline_mode<synchronous>, transform_indices = @transform_1, window_bounds = array<i64: 128, 32>}, {pipeline_mode = #tpu.pipeline_mode<synchronous>, transform_indices = @transform_2, window_bounds = array<i64: 1, 128>}, {transform_indices = @transform_3, window_bounds = array<i64: 128, 32>}, {transform_indices = @transform_4, window_bounds = array<i64: 1, 1, 128>}, {transform_indices = @transform_5, window_bounds = array<i64: 1, 128, 32>}, {transform_indices = @transform_6, window_bounds = array<i64: 1, 1, 128>}, {transform_indices = @transform_7, window_bounds = array<i64: 1, 1, 1>}]} {
    %c0_i32 = arith.constant 0 : i32
    %0 = arith.cmpi eq, %arg1, %c0_i32 : i32
    %1 = arith.extui %0 : i1 to i32
    %c0_i32_0 = arith.constant 0 : i32
    %2 = arith.cmpi ne, %1, %c0_i32_0 : i32
    scf.if %2 {
      %cst_37 = arith.constant 0.000000e+00 : f32
      %51 = vector.broadcast %cst_37 : f32 to vector<1x128x32xf32>
      %c0_38 = arith.constant 0 : index
      %c0_39 = arith.constant 0 : index
      %c0_40 = arith.constant 0 : index
      %52 = vector.load %arg7[%c0_38, %c0_39, %c0_40] : memref<1x128x32xf32, #tpu.memory_space<vmem>>, vector<1x128x32xf32>
      tpu.vector_store %arg7[%c0_38, %c0_39, %c0_40], %51 {strides = array<i32>} : memref<1x128x32xf32, #tpu.memory_space<vmem>>, vector<1x128x32xf32>,
      %cst_41 = arith.constant 0.000000e+00 : f32
      %53 = vector.broadcast %cst_41 : f32 to vector<1x1x128xf32>
      %c0_42 = arith.constant 0 : index
      %c0_43 = arith.constant 0 : index
      %c0_44 = arith.constant 0 : index
      %54 = vector.load %arg8[%c0_42, %c0_43, %c0_44] : memref<1x1x128xf32, #tpu.memory_space<vmem>>, vector<1x1x128xf32>
      tpu.vector_store %arg8[%c0_42, %c0_43, %c0_44], %53 {strides = array<i32>} : memref<1x1x128xf32, #tpu.memory_space<vmem>>, vector<1x1x128xf32>,
      %cst_45 = arith.constant 0.000000e+00 : f32
      %55 = vector.broadcast %cst_45 : f32 to vector<1x1x1xf32>
      %c0_46 = arith.constant 0 : index
      %c0_47 = arith.constant 0 : index
      %c0_48 = arith.constant 0 : index
      %56 = vector.load %arg9[%c0_46, %c0_47, %c0_48] : memref<1x1x1xf32, #tpu.memory_space<vmem>>, vector<1x1x1xf32>
      tpu.vector_store %arg9[%c0_46, %c0_47, %c0_48], %55 {strides = array<i32>} : memref<1x1x1xf32, #tpu.memory_space<vmem>>, vector<1x1x1xf32>,
    } else {
    }
    %c0 = arith.constant 0 : index
    %c0_1 = arith.constant 0 : index
    %3 = vector.load %arg2[%c0, %c0_1] : memref<128x32xf32, #tpu.memory_space<vmem>>, vector<128x32xf32>
    %c0_2 = arith.constant 0 : index
    %c0_3 = arith.constant 0 : index
    %4 = vector.load %arg3[%c0_2, %c0_3] : memref<128x32xf32, #tpu.memory_space<vmem>>, vector<128x32xf32>
    %c0_4 = arith.constant 0 : index
    %c0_5 = arith.constant 0 : index
    %5 = vector.load %arg4[%c0_4, %c0_5] : memref<1x128xf32, #tpu.memory_space<vmem>>, vector<1x128xf32>
    %cst = arith.constant dense<0.000000e+00> : vector<128x128xf32>
    %6 = tpu.matmul %3, %4, %cst {dimension_numbers = #tpu.dot_dimension_numbers<[1], [1], [0], [0], [0, 0, 1, 0], [], []>} : vector<128x32xf32>, vector<128x32xf32>, vector<128x128xf32> -> vector<128x128xf32>
    %7 = vector.broadcast %5 : vector<1x128xf32> to vector<128x128xf32>
    %8 = arith.subf %7, %6 : vector<128x128xf32>
    %cst_6 = arith.constant dense<0x7F800000> : vector<128xf32>
    %9 = vector.multi_reduction <minimumf>, %8, %cst_6 [1] : vector<128x128xf32> to vector<128xf32>
    %10 = vector.shape_cast %9 : vector<128xf32> to vector<128x1xf32>
    %11 = tpu.iota {dimensions = array<i32: 1>} : vector<128x128xi32>
    %12 = vector.broadcast %10 : vector<128x1xf32> to vector<128x128xf32>
    %13 = arith.cmpf ole, %8, %12 : vector<128x128xf32>
    %c128_i32 = arith.constant 128 : i32
    %14 = vector.broadcast %c128_i32 : i32 to vector<128x128xi32>
    %15 = arith.select %13, %11, %14 : vector<128x128xi1>, vector<128x128xi32>
    %cst_7 = arith.constant dense<2147483647> : vector<128xi32>
    %16 = vector.multi_reduction <minsi>, %15, %cst_7 [1] : vector<128x128xi32> to vector<128xi32>
    %17 = vector.shape_cast %16 : vector<128xi32> to vector<128x1xi32>
    %18 = vector.broadcast %17 : vector<128x1xi32> to vector<128x128xi32>
    %19 = arith.cmpi eq, %11, %18 : vector<128x128xi32>
    %20 = arith.extui %19 : vector<128x128xi1> to vector<128x128xi32>
    %21 = arith.sitofp %20 : vector<128x128xi32> to vector<128x128xf32>
    %cst_8 = arith.constant dense<0.000000e+00> : vector<128x32xf32>
    %22 = tpu.matmul %21, %4, %cst_8 {dimension_numbers = #tpu.dot_dimension_numbers<[1], [0], [0], [1], [0, 0, 1, 1], [], []>} : vector<128x128xf32>, vector<128x32xf32>, vector<128x32xf32> -> vector<128x32xf32>
    %c0_9 = arith.constant 0 : index
    %c0_10 = arith.constant 0 : index
    %23 = vector.load %arg5[%c0_9, %c0_10] : memref<128x32xf32, #tpu.memory_space<vmem>>, vector<128x32xf32>
    tpu.vector_store %arg5[%c0_9, %c0_10], %22 {strides = array<i32>} : memref<128x32xf32, #tpu.memory_space<vmem>>, vector<128x32xf32>,
    %24 = tpu.iota {dimensions = array<i32: 1>} : vector<1x128xi32>
    %25 = arith.sitofp %24 : vector<1x128xi32> to vector<1x128xf32>
    %cst_11 = arith.constant dense<0.000000e+00> : vector<1x128xf32>
    %26 = tpu.matmul %25, %21, %cst_11 {dimension_numbers = #tpu.dot_dimension_numbers<[1], [1], [0], [0], [0, 0, 1, 0], [], []>} : vector<1x128xf32>, vector<128x128xf32>, vector<1x128xf32> -> vector<1x128xf32>
    %27 = arith.fptosi %26 : vector<1x128xf32> to vector<1x128xi32>
    %28 = vector.shape_cast %27 : vector<1x128xi32> to vector<1x1x128xi32>
    %c0_12 = arith.constant 0 : index
    %c0_13 = arith.constant 0 : index
    %c0_14 = arith.constant 0 : index
    %29 = vector.load %arg6[%c0_12, %c0_13, %c0_14] : memref<1x1x128xi32, #tpu.memory_space<vmem>>, vector<1x1x128xi32>
    tpu.vector_store %arg6[%c0_12, %c0_13, %c0_14], %28 {strides = array<i32>} : memref<1x1x128xi32, #tpu.memory_space<vmem>>, vector<1x1x128xi32>,
    %30 = arith.subf %22, %3 : vector<128x32xf32>
    %31 = arith.mulf %30, %30 : vector<128x32xf32>
    %cst_15 = arith.constant dense<0.000000e+00> : vector<128xf32>
    %32 = vector.multi_reduction <add>, %31, %cst_15 [1] : vector<128x32xf32> to vector<128xf32>
    %33 = vector.shape_cast %32 : vector<128xf32> to vector<128x1xf32>
    %c0_16 = arith.constant 0 : index
    %c0_17 = arith.constant 0 : index
    %c0_18 = arith.constant 0 : index
    %34 = vector.load %arg7[%c0_16, %c0_17, %c0_18] : memref<1x128x32xf32, #tpu.memory_space<vmem>>, vector<1x128x32xf32>
    %cst_19 = arith.constant dense<0.000000e+00> : vector<128x32xf32>
    %35 = tpu.matmul %21, %3, %cst_19 {dimension_numbers = #tpu.dot_dimension_numbers<[0], [0], [1], [1], [0, 1, 1, 1], [], []>} : vector<128x128xf32>, vector<128x32xf32>, vector<128x32xf32> -> vector<128x32xf32>
    %36 = vector.shape_cast %35 : vector<128x32xf32> to vector<1x128x32xf32>
    %37 = arith.addf %34, %36 : vector<1x128x32xf32>
    %c0_20 = arith.constant 0 : index
    %c0_21 = arith.constant 0 : index
    %c0_22 = arith.constant 0 : index
    %38 = vector.load %arg7[%c0_20, %c0_21, %c0_22] : memref<1x128x32xf32, #tpu.memory_space<vmem>>, vector<1x128x32xf32>
    tpu.vector_store %arg7[%c0_20, %c0_21, %c0_22], %37 {strides = array<i32>} : memref<1x128x32xf32, #tpu.memory_space<vmem>>, vector<1x128x32xf32>,
    %c0_23 = arith.constant 0 : index
    %c0_24 = arith.constant 0 : index
    %c0_25 = arith.constant 0 : index
    %39 = vector.load %arg8[%c0_23, %c0_24, %c0_25] : memref<1x1x128xf32, #tpu.memory_space<vmem>>, vector<1x1x128xf32>
    %cst_26 = arith.constant dense<0.000000e+00> : vector<128xf32>
    %40 = vector.multi_reduction <add>, %21, %cst_26 [0] : vector<128x128xf32> to vector<128xf32>
    %41 = vector.shape_cast %40 : vector<128xf32> to vector<1x128xf32>
    %42 = vector.shape_cast %41 : vector<1x128xf32> to vector<1x1x128xf32>
    %43 = arith.addf %39, %42 : vector<1x1x128xf32>
    %c0_27 = arith.constant 0 : index
    %c0_28 = arith.constant 0 : index
    %c0_29 = arith.constant 0 : index
    %44 = vector.load %arg8[%c0_27, %c0_28, %c0_29] : memref<1x1x128xf32, #tpu.memory_space<vmem>>, vector<1x1x128xf32>
    tpu.vector_store %arg8[%c0_27, %c0_28, %c0_29], %43 {strides = array<i32>} : memref<1x1x128xf32, #tpu.memory_space<vmem>>, vector<1x1x128xf32>,
    %c0_30 = arith.constant 0 : index
    %c0_31 = arith.constant 0 : index
    %c0_32 = arith.constant 0 : index
    %45 = vector.load %arg9[%c0_30, %c0_31, %c0_32] : memref<1x1x1xf32, #tpu.memory_space<vmem>>, vector<1x1x1xf32>
    %cst_33 = arith.constant dense<0.000000e+00> : vector<1xf32>
    %46 = vector.multi_reduction <add>, %33, %cst_33 [0] : vector<128x1xf32> to vector<1xf32>
    %47 = vector.shape_cast %46 : vector<1xf32> to vector<1x1xf32>
    %48 = vector.shape_cast %47 : vector<1x1xf32> to vector<1x1x1xf32>
    %49 = arith.addf %45, %48 : vector<1x1x1xf32>
    %c0_34 = arith.constant 0 : index
    %c0_35 = arith.constant 0 : index
    %c0_36 = arith.constant 0 : index
    %50 = vector.load %arg9[%c0_34, %c0_35, %c0_36] : memref<1x1x1xf32, #tpu.memory_space<vmem>>, vector<1x1x1xf32>
    tpu.vector_store %arg9[%c0_34, %c0_35, %c0_36], %49 {strides = array<i32>} : memref<1x1x1xf32, #tpu.memory_space<vmem>>, vector<1x1x1xf32>,
    return
  }
  func.func @transform_0(%arg0: i32, %arg1: i32) -> (i32, i32) {
    %c1_i32 = arith.constant 1 : i32
    %0 = arith.muli %arg0, %c1_i32 : i32
    %1 = arith.addi %0, %arg1 : i32
    %c0_i32 = arith.constant 0 : i32
    %c0_i32_0 = arith.constant 0 : i32
    return %1, %c0_i32 : i32, i32
  }
  func.func @transform_1(%arg0: i32, %arg1: i32) -> (i32, i32) {
    %c0_i32 = arith.constant 0 : i32
    %c0_i32_0 = arith.constant 0 : i32
    %c0_i32_1 = arith.constant 0 : i32
    return %c0_i32, %c0_i32_0 : i32, i32
  }
  func.func @transform_2(%arg0: i32, %arg1: i32) -> (i32, i32) {
    %c0_i32 = arith.constant 0 : i32
    %c0_i32_0 = arith.constant 0 : i32
    %c0_i32_1 = arith.constant 0 : i32
    return %c0_i32, %c0_i32_0 : i32, i32
  }
  func.func @transform_3(%arg0: i32, %arg1: i32) -> (i32, i32) {
    %c1_i32 = arith.constant 1 : i32
    %0 = arith.muli %arg0, %c1_i32 : i32
    %1 = arith.addi %0, %arg1 : i32
    %c0_i32 = arith.constant 0 : i32
    %c0_i32_0 = arith.constant 0 : i32
    return %1, %c0_i32 : i32, i32
  }
  func.func @transform_4(%arg0: i32, %arg1: i32) -> (i32, i32, i32) {
    %c1_i32 = arith.constant 1 : i32
    %0 = arith.muli %arg0, %c1_i32 : i32
    %1 = arith.addi %0, %arg1 : i32
    %c0_i32 = arith.constant 0 : i32
    %c0_i32_0 = arith.constant 0 : i32
    %c0_i32_1 = arith.constant 0 : i32
    return %1, %c0_i32, %c0_i32_0 : i32, i32, i32
  }
  func.func @transform_5(%arg0: i32, %arg1: i32) -> (i32, i32, i32) {
    %c0_i32 = arith.constant 0 : i32
    %c0_i32_0 = arith.constant 0 : i32
    %c0_i32_1 = arith.constant 0 : i32
    return %arg0, %c0_i32, %c0_i32_0 : i32, i32, i32
  }
  func.func @transform_6(%arg0: i32, %arg1: i32) -> (i32, i32, i32) {
    %c0_i32 = arith.constant 0 : i32
    %c0_i32_0 = arith.constant 0 : i32
    %c0_i32_1 = arith.constant 0 : i32
    return %arg0, %c0_i32, %c0_i32_0 : i32, i32, i32
  }
  func.func @transform_7(%arg0: i32, %arg1: i32) -> (i32, i32, i32) {
    %c0_i32 = arith.constant 0 : i32
    %c0_i32_0 = arith.constant 0 : i32
    %c0_i32_1 = arith.constant 0 : i32
    return %arg0, %c0_i32, %c0_i32_0 : i32, i32, i32
  }
}

</mosaic_0001>

<llo_original>
// kernel: vector_quantizer_forward.1
$region0: #{vector_quantizer_forward.1}
  #allocation0 [shape = 'u32[]', space=smem, size = 0x4, offset = 0x4, fixed_abs, tag = 'smem constant byte address 0x4 - core index']
  #allocation1 [shape = 'u32[144,128]{1,0:T(1,128)}', space=vmem, size = 0x12000, scoped, tag = 'internal scratch']
  %s0 = inlined_call_operand.vmem [shape: f32[128,32], index: 0, kind: input, shape index: {}]
  %s1 = inlined_call_operand.vmem [shape: f32[128,32], index: 1, kind: input, shape index: {}]
  %s2 = inlined_call_operand.vmem [shape: f32[1,128], index: 2, kind: input, shape index: {}]
  %s3 = inlined_call_operand.vmem [shape: f32[128,32], index: 3, kind: output, shape index: {0}]
  %s4 = inlined_call_operand.vmem [shape: s32[1,1,128], index: 4, kind: output, shape index: {1}]
  %s5 = inlined_call_operand.vmem [shape: f32[1,128,32], index: 5, kind: output, shape index: {2}]
  %s6 = inlined_call_operand.vmem [shape: f32[1,1,128], index: 6, kind: output, shape index: {3}]
  %s7 = inlined_call_operand.hbm [shape: f32[1,1,1], index: 7, kind: output, shape index: {4}]
  %8 = xla_tuple %s3, %s4, %s5, %s6, %s7
  %s9 = sld [smem:[#allocation0]]
  $region58: #{vector_quantizer_forward.1} parent=0
    _
  %s11 = ssub.s32 1, %s9
  %s12 = scalar_select 0, %s11, %s9
  $region1: #{vector_quantizer_forward.1} parent=0
    #allocation2 [shape = 'u8[512]{0}', space=vmem, size = 0x400, scoped, tag = 'output window, operand 4, single buffered']
    #allocation3 [shape = 's32[1]{0}', space=sflag, size = 0x4, scoped, tag = 'scoped memory for vector_quantizer_forward.1']
    %13 = vsyncpa [#allocation3], 0
    // Predicated region
    $region2: #{vector_quantizer_forward.1} parent=1 // pred_check
      _
    $region3: #{vector_quantizer_forward.1} parent=1 // pred_check_branch
      %15 = sbr.rel (0) target = $region5
    $region4: #{vector_quantizer_forward.1} parent=1 // pred_region
      %s16 = sadd.s32 0, 0
      %s17 = smul.u32 16, %s16
      %p18 = scmp.lt.s32.totalorder %s17, 15
      %s19 = scalar_select %p18, %s17, 15
      %s20 = smul.addr %s19, 8
      %s21 = scalar_lea.vmem %s0, %s20
      %s22 = sadd.s32 0, 0
      %s23 = smul.u32 16, %s22
    $region5: #{vector_quantizer_forward.1} parent=1 // pred_fallthru
      _
    // Predicated region
    $region6: #{vector_quantizer_forward.1} parent=1 // pred_check
      _
    $region7: #{vector_quantizer_forward.1} parent=1 // pred_check_branch
      %25 = sbr.rel (0) target = $region9
    $region8: #{vector_quantizer_forward.1} parent=1 // pred_region
      _
    $region9: #{vector_quantizer_forward.1} parent=1 // pred_fallthru
      _
    // Predicated region
    $region10: #{vector_quantizer_forward.1} parent=1 // pred_check
      _
    $region11: #{vector_quantizer_forward.1} parent=1 // pred_check_branch
      %27 = sbr.rel (0) target = $region13
    $region12: #{vector_quantizer_forward.1} parent=1 // pred_region
      _
    $region13: #{vector_quantizer_forward.1} parent=1 // pred_fallthru
      _
    %s28 = sadd.s32 0, 0
    %s29 = smul.u32 16, %s28
    %p30 = scmp.lt.s32.totalorder %s29, 15
    %s31 = scalar_select %p30, %s29, 15
    %s32 = smul.addr %s31, 8
    %s33 = scalar_lea.vmem %s0, %s32
    %s34 = sadd.s32 0, 0
    %s35 = smul.u32 16, %s34
    %p36 = scmp.lt.s32.totalorder %s35, 15
    %s37 = scalar_select %p36, %s35, 15
    %s38 = smul.addr %s37, 8
    %s39 = scalar_lea.vmem %s3, %s38
    %s40 = sadd.s32 0, 0
    %p41 = scmp.lt.s32.totalorder %s40, 0
    %s42 = scalar_select %p41, %s40, 0
    %s43 = scalar_lea.vmem %s4, %s42
    %s44 = sadd.s32 0, 0
    %s45 = smul.u32 16, %s44
    %p46 = scmp.lt.s32.totalorder %s45, 15
    %s47 = scalar_select %p46, %s45, 15
    %s48 = smul.addr %s47, 8
    %s49 = scalar_lea.vmem %s0, %s48
    %s50 = sadd.s32 0, 0
    %s51 = smul.u32 16, %s50
    %s52 = sadd.s32 0, 0
    %s53 = smul.u32 16, %s52
    %p54 = scmp.lt.s32.totalorder %s53, 15
    %s55 = scalar_select %p54, %s53, 15
    %s56 = smul.addr %s55, 8
    %s57 = scalar_lea.vmem %s3, %s56
    %s58 = sadd.s32 0, 0
    %s59 = smul.u32 16, %s58
    %s60 = sadd.s32 0, 0
    %p61 = scmp.lt.s32.totalorder %s60, 0
    %s62 = scalar_select %p61, %s60, 0
    %s63 = scalar_lea.vmem %s4, %s62
    %s64 = sadd.s32 0, 0
    %p65 = scmp.eq.s32.totalorder 0, 0
    // Predicated region
    $region14: #{vector_quantizer_forward.1} parent=1 // pred_check
      %p66 = pneg %p65
    $region15: #{vector_quantizer_forward.1} parent=1 // pred_check_branch
      %68 = sbr.rel (%p66) target = $region17
    $region16: #{vector_quantizer_forward.1} parent=1 // pred_region
      %vm69 = vcmask 261120
      %70 = vst.msk [vmem:[%s5] sm:$0xff] %vm69, 0.0
      %71 = vst.msk [vmem:[%s5 + $0x8] sm:$0xff] %vm69, 0.0
      %72 = vst.msk [vmem:[%s5 + $0x10] sm:$0xff] %vm69, 0.0
      %73 = vst.msk [vmem:[%s5 + $0x18] sm:$0xff] %vm69, 0.0
      %74 = vst.msk [vmem:[%s5 + $0x20] sm:$0xff] %vm69, 0.0
      %75 = vst.msk [vmem:[%s5 + $0x28] sm:$0xff] %vm69, 0.0
      %76 = vst.msk [vmem:[%s5 + $0x30] sm:$0xff] %vm69, 0.0
      %77 = vst.msk [vmem:[%s5 + $0x38] sm:$0xff] %vm69, 0.0
      %78 = vst.msk [vmem:[%s5 + $0x40] sm:$0xff] %vm69, 0.0
      %79 = vst.msk [vmem:[%s5 + $0x48] sm:$0xff] %vm69, 0.0
      %80 = vst.msk [vmem:[%s5 + $0x50] sm:$0xff] %vm69, 0.0
      %81 = vst.msk [vmem:[%s5 + $0x58] sm:$0xff] %vm69, 0.0
      %82 = vst.msk [vmem:[%s5 + $0x60] sm:$0xff] %vm69, 0.0
      %83 = vst.msk [vmem:[%s5 + $0x68] sm:$0xff] %vm69, 0.0
      %84 = vst.msk [vmem:[%s5 + $0x70] sm:$0xff] %vm69, 0.0
      %85 = vst.msk [vmem:[%s5 + $0x78] sm:$0xff] %vm69, 0.0
      %86 = vst [vmem:[%s6] sm:$0x1] 0.0
      %vm87 = vcmask 0
      %88 = vst.msk [vmem:[#allocation2] sm:$0x1] %vm87, 0.0
    $region17: #{vector_quantizer_forward.1} parent=1 // pred_fallthru
      _
    %v89 = vld [vmem:[%s49] sm:$0xff]
    %v90 = vld [vmem:[%s49 + $0x8] sm:$0xff]
    %v91 = vld [vmem:[%s49 + $0x10] sm:$0xff]
    %v92 = vld [vmem:[%s49 + $0x18] sm:$0xff]
    %v93 = vld [vmem:[%s49 + $0x20] sm:$0xff]
    %v94 = vld [vmem:[%s49 + $0x28] sm:$0xff]
    %v95 = vld [vmem:[%s49 + $0x30] sm:$0xff]
    %v96 = vld [vmem:[%s49 + $0x38] sm:$0xff]
    %v97 = vld [vmem:[%s49 + $0x40] sm:$0xff]
    %v98 = vld [vmem:[%s49 + $0x48] sm:$0xff]
    %v99 = vld [vmem:[%s49 + $0x50] sm:$0xff]
    %v100 = vld [vmem:[%s49 + $0x58] sm:$0xff]
    %v101 = vld [vmem:[%s49 + $0x60] sm:$0xff]
    %v102 = vld [vmem:[%s49 + $0x68] sm:$0xff]
    %v103 = vld [vmem:[%s49 + $0x70] sm:$0xff]
    %v104 = vld [vmem:[%s49 + $0x78] sm:$0xff]
    %v105 = vld [vmem:[%s1] sm:$0xff]
    %v106 = vld [vmem:[%s1 + $0x8] sm:$0xff]
    %v107 = vld [vmem:[%s1 + $0x10] sm:$0xff]
    %v108 = vld [vmem:[%s1 + $0x18] sm:$0xff]
    %v109 = vld [vmem:[%s1 + $0x20] sm:$0xff]
    %v110 = vld [vmem:[%s1 + $0x28] sm:$0xff]
    %v111 = vld [vmem:[%s1 + $0x30] sm:$0xff]
    %v112 = vld [vmem:[%s1 + $0x38] sm:$0xff]
    %v113 = vld [vmem:[%s1 + $0x40] sm:$0xff]
    %v114 = vld [vmem:[%s1 + $0x48] sm:$0xff]
    %v115 = vld [vmem:[%s1 + $0x50] sm:$0xff]
    %v116 = vld [vmem:[%s1 + $0x58] sm:$0xff]
    %v117 = vld [vmem:[%s1 + $0x60] sm:$0xff]
    %v118 = vld [vmem:[%s1 + $0x68] sm:$0xff]
    %v119 = vld [vmem:[%s1 + $0x70] sm:$0xff]
    %v120 = vld [vmem:[%s1 + $0x78] sm:$0xff]
    %v121 = vld [vmem:[%s2] sm:$0x1]
    %vm122 = vcmask 261120
    %v124 = vsel %vm122, %v89, 0
    %v127 = vsel %vm122, %v90, 0
    %v130 = vsel %vm122, %v91, 0
    %v133 = vsel %vm122, %v92, 0
    %v136 = vsel %vm122, %v93, 0
    %v139 = vsel %vm122, %v94, 0
    %v142 = vsel %vm122, %v95, 0
    %v145 = vsel %vm122, %v96, 0
    %v148 = vsel %vm122, %v97, 0
    %v151 = vsel %vm122, %v98, 0
    %v154 = vsel %vm122, %v99, 0
    %v157 = vsel %vm122, %v100, 0
    %v160 = vsel %vm122, %v101, 0
    %v163 = vsel %vm122, %v102, 0
    %v166 = vsel %vm122, %v103, 0
    %v169 = vsel %vm122, %v104, 0
    %v172 = vsel %vm122, %v105, 0
    %v175 = vsel %vm122, %v106, 0
    %v178 = vsel %vm122, %v107, 0
    %v181 = vsel %vm122, %v108, 0
    %v184 = vsel %vm122, %v109, 0
    %v187 = vsel %vm122, %v110, 0
    %v190 = vsel %vm122, %v111, 0
    %v193 = vsel %vm122, %v112, 0
    %v196 = vsel %vm122, %v113, 0
    %v199 = vsel %vm122, %v114, 0
    %v202 = vsel %vm122, %v115, 0
    %v205 = vsel %vm122, %v116, 0
    %v208 = vsel %vm122, %v117, 0
    %v211 = vsel %vm122, %v118, 0
    %v214 = vsel %vm122, %v119, 0
    %v217 = vsel %vm122, %v120, 0
    %219 = vmatprep.subr.mxu0 0.0
    %220 = vmatpush1.xpose.msra.mxu0 %v172
    %221 = vmatprep.subr.mxu0 0.0
    %222 = vmatpush1.xpose.msra.mxu0 %v175
    %223 = vmatprep.subr.mxu0 0.0
    %224 = vmatpush1.xpose.msra.mxu0 %v178
    %225 = vmatprep.subr.mxu0 0.0
    %226 = vmatpush1.xpose.msra.mxu0 %v181
    %227 = vmatprep.subr.mxu0 0.0
    %228 = vmatpush1.xpose.msra.mxu0 %v184
    %229 = vmatprep.subr.mxu0 0.0
    %230 = vmatpush1.xpose.msra.mxu0 %v187
    %231 = vmatprep.subr.mxu0 0.0
    %232 = vmatpush1.xpose.msra.mxu0 %v190
    %233 = vmatprep.subr.mxu0 0.0
    %234 = vmatpush1.xpose.msra.mxu0 %v193
    %235 = vmatprep.subr.mxu0 0.0
    %236 = vmatpush1.xpose.msra.mxu0 %v196
    %237 = vmatprep.subr.mxu0 0.0
    %238 = vmatpush1.xpose.msra.mxu0 %v199
    %239 = vmatprep.subr.mxu0 0.0
    %240 = vmatpush1.xpose.msra.mxu0 %v202
    %241 = vmatprep.subr.mxu0 0.0
    %242 = vmatpush1.xpose.msra.mxu0 %v205
    %243 = vmatprep.subr.mxu0 0.0
    %244 = vmatpush1.xpose.msra.mxu0 %v208
    %245 = vmatprep.subr.mxu0 0.0
    %246 = vmatpush1.xpose.msra.mxu0 %v211
    %247 = vmatprep.subr.mxu0 0.0
    %248 = vmatpush1.xpose.msra.mxu0 %v214
    %249 = vmatprep.subr.mxu0 0.0
    %250 = vmatpush1.xpose.msra.mxu0 %v217
    %251 = vmatprep.subr.mxu0 0.0
    %252 = vmatpush1.xpose.msra.mxu0 0.0
    %253 = vmatprep.subr.mxu0 0.0
    %254 = vmatpush1.xpose.msra.mxu0 0.0
    %255 = vmatprep.subr.mxu0 0.0
    %256 = vmatpush1.xpose.msra.mxu0 0.0
    %257 = vmatprep.subr.mxu0 0.0
    %258 = vmatpush1.xpose.msra.mxu0 0.0
    %259 = vmatprep.subr.mxu0 0.0
    %260 = vmatpush1.xpose.msra.mxu0 0.0
    %261 = vmatprep.subr.mxu0 0.0
    %262 = vmatpush1.xpose.msra.mxu0 0.0
    %263 = vmatprep.subr.mxu0 0.0
    %264 = vmatpush1.xpose.msra.mxu0 0.0
    %265 = vmatprep.subr.mxu0 0.0
    %266 = vmatpush1.xpose.msra.mxu0 0.0
    %267 = vmatprep.subr.mxu0 0.0
    %268 = vmatpush1.xpose.msra.mxu0 0.0
    %269 = vmatprep.subr.mxu0 0.0
    %270 = vmatpush1.xpose.msra.mxu0 0.0
    %271 = vmatprep.subr.mxu0 0.0
    %272 = vmatpush1.xpose.msra.mxu0 0.0
    %273 = vmatprep.subr.mxu0 0.0
    %274 = vmatpush1.xpose.msra.mxu0 0.0
    %275 = vmatprep.subr.mxu0 0.0
    %276 = vmatpush1.xpose.msra.mxu0 0.0
    %277 = vmatprep.subr.mxu0 0.0
    %278 = vmatpush1.xpose.msra.mxu0 0.0
    %279 = vmatprep.subr.mxu0 0.0
    %280 = vmatpush1.xpose.msra.mxu0 0.0
    %281 = vmatprep.subr.mxu0 0.0
    %282 = vmatpush1.xpose.msra.mxu0 0.0
    %283 = vmatprep.mubr.f32.mxu0 0.0
    %284 = vmatmul.mubr.f32.gmra.mrb[0].mxu0 %v124
    %v285 = vpop.f32.mrb[0].mxu0
    %v286 = vadd.f32 0.0, %v285
    %v287 = vpop.f32.mrb[0].mxu0
    %288 = vmatprep.mubr.f32.mxu0 0.0
    %289 = vmatmul.mubr.f32.gmra.mrb[0].mxu0 %v127
    %v290 = vpop.f32.mrb[0].mxu0
    %v291 = vadd.f32 0.0, %v290
    %v292 = vpop.f32.mrb[0].mxu0
    %293 = vmatprep.mubr.f32.mxu0 0.0
    %294 = vmatmul.mubr.f32.gmra.mrb[0].mxu0 %v130
    %v295 = vpop.f32.mrb[0].mxu0
    %v296 = vadd.f32 0.0, %v295
    %v297 = vpop.f32.mrb[0].mxu0
    %298 = vmatprep.mubr.f32.mxu0 0.0
    %299 = vmatmul.mubr.f32.gmra.mrb[0].mxu0 %v133
    %v300 = vpop.f32.mrb[0].mxu0
    %v301 = vadd.f32 0.0, %v300
    %v302 = vpop.f32.mrb[0].mxu0
    %303 = vmatprep.mubr.f32.mxu0 0.0
    %304 = vmatmul.mubr.f32.gmra.mrb[0].mxu0 %v136
    %v305 = vpop.f32.mrb[0].mxu0
    %v306 = vadd.f32 0.0, %v305
    %v307 = vpop.f32.mrb[0].mxu0
    %308 = vmatprep.mubr.f32.mxu0 0.0
    %309 = vmatmul.mubr.f32.gmra.mrb[0].mxu0 %v139
    %v310 = vpop.f32.mrb[0].mxu0
    %v311 = vadd.f32 0.0, %v310
    %v312 = vpop.f32.mrb[0].mxu0
    %313 = vmatprep.mubr.f32.mxu0 0.0
    %314 = vmatmul.mubr.f32.gmra.mrb[0].mxu0 %v142
    %v315 = vpop.f32.mrb[0].mxu0
    %v316 = vadd.f32 0.0, %v315
    %v317 = vpop.f32.mrb[0].mxu0
    %318 = vmatprep.mubr.f32.mxu0 0.0
    %319 = vmatmul.mubr.f32.gmra.mrb[0].mxu0 %v145
    %v320 = vpop.f32.mrb[0].mxu0
    %v321 = vadd.f32 0.0, %v320
    %v322 = vpop.f32.mrb[0].mxu0
    %323 = vmatprep.mubr.f32.mxu0 0.0
    %324 = vmatmul.mubr.f32.gmra.mrb[0].mxu0 %v148
    %v325 = vpop.f32.mrb[0].mxu0
    %v326 = vadd.f32 0.0, %v325
    %v327 = vpop.f32.mrb[0].mxu0
    %328 = vmatprep.mubr.f32.mxu0 0.0
    %329 = vmatmul.mubr.f32.gmra.mrb[0].mxu0 %v151
    %v330 = vpop.f32.mrb[0].mxu0
    %v331 = vadd.f32 0.0, %v330
    %v332 = vpop.f32.mrb[0].mxu0
    %333 = vmatprep.mubr.f32.mxu0 0.0
    %334 = vmatmul.mubr.f32.gmra.mrb[0].mxu0 %v154
    %v335 = vpop.f32.mrb[0].mxu0
    %v336 = vadd.f32 0.0, %v335
    %v337 = vpop.f32.mrb[0].mxu0
    %338 = vmatprep.mubr.f32.mxu0 0.0
    %339 = vmatmul.mubr.f32.gmra.mrb[0].mxu0 %v157
    %v340 = vpop.f32.mrb[0].mxu0
    %v341 = vadd.f32 0.0, %v340
    %v342 = vpop.f32.mrb[0].mxu0
    %343 = vmatprep.mubr.f32.mxu0 0.0
    %344 = vmatmul.mubr.f32.gmra.mrb[0].mxu0 %v160
    %v345 = vpop.f32.mrb[0].mxu0
    %v346 = vadd.f32 0.0, %v345
    %v347 = vpop.f32.mrb[0].mxu0
    %348 = vmatprep.mubr.f32.mxu0 0.0
    %349 = vmatmul.mubr.f32.gmra.mrb[0].mxu0 %v163
    %v350 = vpop.f32.mrb[0].mxu0
    %v351 = vadd.f32 0.0, %v350
    %v352 = vpop.f32.mrb[0].mxu0
    %353 = vmatprep.mubr.f32.mxu0 0.0
    %354 = vmatmul.mubr.f32.gmra.mrb[0].mxu0 %v166
    %v355 = vpop.f32.mrb[0].mxu0
    %v356 = vadd.f32 0.0, %v355
    %v357 = vpop.f32.mrb[0].mxu0
    %358 = vmatprep.mubr.f32.mxu0 0.0
    %359 = vmatmul.mubr.f32.gmra.mrb[0].mxu0 %v169
    %v360 = vpop.f32.mrb[0].mxu0
    %v361 = vadd.f32 0.0, %v360
    %v362 = vpop.f32.mrb[0].mxu0
    %363 = vdwg.mxu0
    %v365 = vlaneseq
    %v366 = vshrl.u32 %v365, 7
    %v367 = vsub.s32 0, %v366
    %v368 = vrot.slane %v121, %v367
    %v370 = vsub.f32 %v368, %v286
    %v371 = vsub.f32 %v368, %v291
    %v372 = vsub.f32 %v368, %v296
    %v373 = vsub.f32 %v368, %v301
    %v374 = vsub.f32 %v368, %v306
    %v375 = vsub.f32 %v368, %v311
    %v376 = vsub.f32 %v368, %v316
    %v377 = vsub.f32 %v368, %v321
    %v378 = vsub.f32 %v368, %v326
    %v379 = vsub.f32 %v368, %v331
    %v380 = vsub.f32 %v368, %v336
    %v381 = vsub.f32 %v368, %v341
    %v382 = vsub.f32 %v368, %v346
    %v383 = vsub.f32 %v368, %v351
    %v384 = vsub.f32 %v368, %v356
    %v385 = vsub.f32 %v368, %v361
    %386 = vmin.xlane.f32.xlu0 %v370
    %v387 = vpop.xlane.xlu0 %386
    %388 = vmin.xlane.f32.xlu0 %v371
    %v389 = vpop.xlane.xlu0 %388
    %390 = vmin.xlane.f32.xlu0 %v372
    %v391 = vpop.xlane.xlu0 %390
    %392 = vmin.xlane.f32.xlu0 %v373
    %v393 = vpop.xlane.xlu0 %392
    %394 = vmin.xlane.f32.xlu0 %v374
    %v395 = vpop.xlane.xlu0 %394
    %396 = vmin.xlane.f32.xlu0 %v375
    %v397 = vpop.xlane.xlu0 %396
    %398 = vmin.xlane.f32.xlu0 %v376
    %v399 = vpop.xlane.xlu0 %398
    %400 = vmin.xlane.f32.xlu0 %v377
    %v401 = vpop.xlane.xlu0 %400
    %402 = vmin.xlane.f32.xlu0 %v378
    %v403 = vpop.xlane.xlu0 %402
    %404 = vmin.xlane.f32.xlu0 %v379
    %v405 = vpop.xlane.xlu0 %404
    %406 = vmin.xlane.f32.xlu0 %v380
    %v407 = vpop.xlane.xlu0 %406
    %408 = vmin.xlane.f32.xlu0 %v381
    %v409 = vpop.xlane.xlu0 %408
    %410 = vmin.xlane.f32.xlu0 %v382
    %v411 = vpop.xlane.xlu0 %410
    %412 = vmin.xlane.f32.xlu0 %v383
    %v413 = vpop.xlane.xlu0 %412
    %414 = vmin.xlane.f32.xlu0 %v384
    %v415 = vpop.xlane.xlu0 %414
    %416 = vmin.xlane.f32.xlu0 %v385
    %v417 = vpop.xlane.xlu0 %416
    %v418 = vlaneseq
    %v419 = vand.u32 %v418, 127
    %vm420 = vcmp.le.f32.partialorder %v370, %v387
    %vm421 = vcmp.le.f32.partialorder %v371, %v389
    %vm422 = vcmp.le.f32.partialorder %v372, %v391
    %vm423 = vcmp.le.f32.partialorder %v373, %v393
    %vm424 = vcmp.le.f32.partialorder %v374, %v395
    %vm425 = vcmp.le.f32.partialorder %v375, %v397
    %vm426 = vcmp.le.f32.partialorder %v376, %v399
    %vm427 = vcmp.le.f32.partialorder %v377, %v401
    %vm428 = vcmp.le.f32.partialorder %v378, %v403
    %vm429 = vcmp.le.f32.partialorder %v379, %v405
    %vm430 = vcmp.le.f32.partialorder %v380, %v407
    %vm431 = vcmp.le.f32.partialorder %v381, %v409
    %vm432 = vcmp.le.f32.partialorder %v382, %v411
    %vm433 = vcmp.le.f32.partialorder %v383, %v413
    %vm434 = vcmp.le.f32.partialorder %v384, %v415
    %vm435 = vcmp.le.f32.partialorder %v385, %v417
    %v436 = vsel %vm420, %v419, 128
    %v437 = vsel %vm421, %v419, 128
    %v438 = vsel %vm422, %v419, 128
    %v439 = vsel %vm423, %v419, 128
    %v440 = vsel %vm424, %v419, 128
    %v441 = vsel %vm425, %v419, 128
    %v442 = vsel %vm426, %v419, 128
    %v443 = vsel %vm427, %v419, 128
    %v444 = vsel %vm428, %v419, 128
    %v445 = vsel %vm429, %v419, 128
    %v446 = vsel %vm430, %v419, 128
    %v447 = vsel %vm431, %v419, 128
    %v448 = vsel %vm432, %v419, 128
    %v449 = vsel %vm433, %v419, 128
    %v450 = vsel %vm434, %v419, 128
    %v451 = vsel %vm435, %v419, 128
    %v452 = vand.u32 %v436, 65535
    %v453 = vshra.s32 %v436, 16
    %v454 = vcvt.s32.f32 %v452
    %v455 = vcvt.s32.f32 %v453
    %456 = vmin.xlane.f32.xlu0 %v455
    %v457 = vpop.xlane.xlu0 %456
    %vm458 = vcmp.eq.f32.partialorder %v455, %v457
    %v459 = vsel %vm458, %v454, inf
    %460 = vmin.xlane.f32.xlu0 %v459
    %v461 = vpop.xlane.xlu0 %460
    %v462 = vcvt.f32.s32 %v461
    %v463 = vcvt.f32.s32 %v457
    %v464 = vshll.u32 %v463, 16
    %v465 = vadd.s32 %v464, %v462
    %v466 = vand.u32 %v437, 65535
    %v467 = vshra.s32 %v437, 16
    %v468 = vcvt.s32.f32 %v466
    %v469 = vcvt.s32.f32 %v467
    %470 = vmin.xlane.f32.xlu0 %v469
    %v471 = vpop.xlane.xlu0 %470
    %vm472 = vcmp.eq.f32.partialorder %v469, %v471
    %v473 = vsel %vm472, %v468, inf
    %474 = vmin.xlane.f32.xlu0 %v473
    %v475 = vpop.xlane.xlu0 %474
    %v476 = vcvt.f32.s32 %v475
    %v477 = vcvt.f32.s32 %v471
    %v478 = vshll.u32 %v477, 16
    %v479 = vadd.s32 %v478, %v476
    %v480 = vand.u32 %v438, 65535
    %v481 = vshra.s32 %v438, 16
    %v482 = vcvt.s32.f32 %v480
    %v483 = vcvt.s32.f32 %v481
    %484 = vmin.xlane.f32.xlu0 %v483
    %v485 = vpop.xlane.xlu0 %484
    %vm486 = vcmp.eq.f32.partialorder %v483, %v485
    %v487 = vsel %vm486, %v482, inf
    %488 = vmin.xlane.f32.xlu0 %v487
    %v489 = vpop.xlane.xlu0 %488
    %v490 = vcvt.f32.s32 %v489
    %v491 = vcvt.f32.s32 %v485
    %v492 = vshll.u32 %v491, 16
    %v493 = vadd.s32 %v492, %v490
    %v494 = vand.u32 %v439, 65535
    %v495 = vshra.s32 %v439, 16
    %v496 = vcvt.s32.f32 %v494
    %v497 = vcvt.s32.f32 %v495
    %498 = vmin.xlane.f32.xlu0 %v497
    %v499 = vpop.xlane.xlu0 %498
    %vm500 = vcmp.eq.f32.partialorder %v497, %v499
    %v501 = vsel %vm500, %v496, inf
    %502 = vmin.xlane.f32.xlu0 %v501
    %v503 = vpop.xlane.xlu0 %502
    %v504 = vcvt.f32.s32 %v503
    %v505 = vcvt.f32.s32 %v499
    %v506 = vshll.u32 %v505, 16
    %v507 = vadd.s32 %v506, %v504
    %v508 = vand.u32 %v440, 65535
    %v509 = vshra.s32 %v440, 16
    %v510 = vcvt.s32.f32 %v508
    %v511 = vcvt.s32.f32 %v509
    %512 = vmin.xlane.f32.xlu0 %v511
    %v513 = vpop.xlane.xlu0 %512
    %vm514 = vcmp.eq.f32.partialorder %v511, %v513
    %v515 = vsel %vm514, %v510, inf
    %516 = vmin.xlane.f32.xlu0 %v515
    %v517 = vpop.xlane.xlu0 %516
    %v518 = vcvt.f32.s32 %v517
    %v519 = vcvt.f32.s32 %v513
    %v520 = vshll.u32 %v519, 16
    %v521 = vadd.s32 %v520, %v518
    %v522 = vand.u32 %v441, 65535
    %v523 = vshra.s32 %v441, 16
    %v524 = vcvt.s32.f32 %v522
    %v525 = vcvt.s32.f32 %v523
    %526 = vmin.xlane.f32.xlu0 %v525
    %v527 = vpop.xlane.xlu0 %526
    %vm528 = vcmp.eq.f32.partialorder %v525, %v527
    %v529 = vsel %vm528, %v524, inf
    %530 = vmin.xlane.f32.xlu0 %v529
    %v531 = vpop.xlane.xlu0 %530
    %v532 = vcvt.f32.s32 %v531
    %v533 = vcvt.f32.s32 %v527
    %v534 = vshll.u32 %v533, 16
    %v535 = vadd.s32 %v534, %v532
    %v536 = vand.u32 %v442, 65535
    %v537 = vshra.s32 %v442, 16
    %v538 = vcvt.s32.f32 %v536
    %v539 = vcvt.s32.f32 %v537
    %540 = vmin.xlane.f32.xlu0 %v539
    %v541 = vpop.xlane.xlu0 %540
    %vm542 = vcmp.eq.f32.partialorder %v539, %v541
    %v543 = vsel %vm542, %v538, inf
    %544 = vmin.xlane.f32.xlu0 %v543
    %v545 = vpop.xlane.xlu0 %544
    %v546 = vcvt.f32.s32 %v545
    %v547 = vcvt.f32.s32 %v541
    %v548 = vshll.u32 %v547, 16
    %v549 = vadd.s32 %v548, %v546
    %v550 = vand.u32 %v443, 65535
    %v551 = vshra.s32 %v443, 16
    %v552 = vcvt.s32.f32 %v550
    %v553 = vcvt.s32.f32 %v551
    %554 = vmin.xlane.f32.xlu0 %v553
    %v555 = vpop.xlane.xlu0 %554
    %vm556 = vcmp.eq.f32.partialorder %v553, %v555
    %v557 = vsel %vm556, %v552, inf
    %558 = vmin.xlane.f32.xlu0 %v557
    %v559 = vpop.xlane.xlu0 %558
    %v560 = vcvt.f32.s32 %v559
    %v561 = vcvt.f32.s32 %v555
    %v562 = vshll.u32 %v561, 16
    %v563 = vadd.s32 %v562, %v560
    %v564 = vand.u32 %v444, 65535
    %v565 = vshra.s32 %v444, 16
    %v566 = vcvt.s32.f32 %v564
    %v567 = vcvt.s32.f32 %v565
    %568 = vmin.xlane.f32.xlu0 %v567
    %v569 = vpop.xlane.xlu0 %568
    %vm570 = vcmp.eq.f32.partialorder %v567, %v569
    %v571 = vsel %vm570, %v566, inf
    %572 = vmin.xlane.f32.xlu0 %v571
    %v573 = vpop.xlane.xlu0 %572
    %v574 = vcvt.f32.s32 %v573
    %v575 = vcvt.f32.s32 %v569
    %v576 = vshll.u32 %v575, 16
    %v577 = vadd.s32 %v576, %v574
    %v578 = vand.u32 %v445, 65535
    %v579 = vshra.s32 %v445, 16
    %v580 = vcvt.s32.f32 %v578
    %v581 = vcvt.s32.f32 %v579
    %582 = vmin.xlane.f32.xlu0 %v581
    %v583 = vpop.xlane.xlu0 %582
    %vm584 = vcmp.eq.f32.partialorder %v581, %v583
    %v585 = vsel %vm584, %v580, inf
    %586 = vmin.xlane.f32.xlu0 %v585
    %v587 = vpop.xlane.xlu0 %586
    %v588 = vcvt.f32.s32 %v587
    %v589 = vcvt.f32.s32 %v583
    %v590 = vshll.u32 %v589, 16
    %v591 = vadd.s32 %v590, %v588
    %v592 = vand.u32 %v446, 65535
    %v593 = vshra.s32 %v446, 16
    %v594 = vcvt.s32.f32 %v592
    %v595 = vcvt.s32.f32 %v593
    %596 = vmin.xlane.f32.xlu0 %v595
    %v597 = vpop.xlane.xlu0 %596
    %vm598 = vcmp.eq.f32.partialorder %v595, %v597
    %v599 = vsel %vm598, %v594, inf
    %600 = vmin.xlane.f32.xlu0 %v599
    %v601 = vpop.xlane.xlu0 %600
    %v602 = vcvt.f32.s32 %v601
    %v603 = vcvt.f32.s32 %v597
    %v604 = vshll.u32 %v603, 16
    %v605 = vadd.s32 %v604, %v602
    %v606 = vand.u32 %v447, 65535
    %v607 = vshra.s32 %v447, 16
    %v608 = vcvt.s32.f32 %v606
    %v609 = vcvt.s32.f32 %v607
    %610 = vmin.xlane.f32.xlu0 %v609
    %v611 = vpop.xlane.xlu0 %610
    %vm612 = vcmp.eq.f32.partialorder %v609, %v611
    %v613 = vsel %vm612, %v608, inf
    %614 = vmin.xlane.f32.xlu0 %v613
    %v615 = vpop.xlane.xlu0 %614
    %v616 = vcvt.f32.s32 %v615
    %v617 = vcvt.f32.s32 %v611
    %v618 = vshll.u32 %v617, 16
    %v619 = vadd.s32 %v618, %v616
    %v620 = vand.u32 %v448, 65535
    %v621 = vshra.s32 %v448, 16
    %v622 = vcvt.s32.f32 %v620
    %v623 = vcvt.s32.f32 %v621
    %624 = vmin.xlane.f32.xlu0 %v623
    %v625 = vpop.xlane.xlu0 %624
    %vm626 = vcmp.eq.f32.partialorder %v623, %v625
    %v627 = vsel %vm626, %v622, inf
    %628 = vmin.xlane.f32.xlu0 %v627
    %v629 = vpop.xlane.xlu0 %628
    %v630 = vcvt.f32.s32 %v629
    %v631 = vcvt.f32.s32 %v625
    %v632 = vshll.u32 %v631, 16
    %v633 = vadd.s32 %v632, %v630
    %v634 = vand.u32 %v449, 65535
    %v635 = vshra.s32 %v449, 16
    %v636 = vcvt.s32.f32 %v634
    %v637 = vcvt.s32.f32 %v635
    %638 = vmin.xlane.f32.xlu0 %v637
    %v639 = vpop.xlane.xlu0 %638
    %vm640 = vcmp.eq.f32.partialorder %v637, %v639
    %v641 = vsel %vm640, %v636, inf
    %642 = vmin.xlane.f32.xlu0 %v641
    %v643 = vpop.xlane.xlu0 %642
    %v644 = vcvt.f32.s32 %v643
    %v645 = vcvt.f32.s32 %v639
    %v646 = vshll.u32 %v645, 16
    %v647 = vadd.s32 %v646, %v644
    %v648 = vand.u32 %v450, 65535
    %v649 = vshra.s32 %v450, 16
    %v650 = vcvt.s32.f32 %v648
    %v651 = vcvt.s32.f32 %v649
    %652 = vmin.xlane.f32.xlu0 %v651
    %v653 = vpop.xlane.xlu0 %652
    %vm654 = vcmp.eq.f32.partialorder %v651, %v653
    %v655 = vsel %vm654, %v650, inf
    %656 = vmin.xlane.f32.xlu0 %v655
    %v657 = vpop.xlane.xlu0 %656
    %v658 = vcvt.f32.s32 %v657
    %v659 = vcvt.f32.s32 %v653
    %v660 = vshll.u32 %v659, 16
    %v661 = vadd.s32 %v660, %v658
    %v662 = vand.u32 %v451, 65535
    %v663 = vshra.s32 %v451, 16
    %v664 = vcvt.s32.f32 %v662
    %v665 = vcvt.s32.f32 %v663
    %666 = vmin.xlane.f32.xlu0 %v665
    %v667 = vpop.xlane.xlu0 %666
    %vm668 = vcmp.eq.f32.partialorder %v665, %v667
    %v669 = vsel %vm668, %v664, inf
    %670 = vmin.xlane.f32.xlu0 %v669
    %v671 = vpop.xlane.xlu0 %670
    %v672 = vcvt.f32.s32 %v671
    %v673 = vcvt.f32.s32 %v667
    %v674 = vshll.u32 %v673, 16
    %v675 = vadd.s32 %v674, %v672
    %vm676 = vcmp.eq.s32.totalorder %v419, %v465
    %vm677 = vcmp.eq.s32.totalorder %v419, %v479
    %vm678 = vcmp.eq.s32.totalorder %v419, %v493
    %vm679 = vcmp.eq.s32.totalorder %v419, %v507
    %vm680 = vcmp.eq.s32.totalorder %v419, %v521
    %vm681 = vcmp.eq.s32.totalorder %v419, %v535
    %vm682 = vcmp.eq.s32.totalorder %v419, %v549
    %vm683 = vcmp.eq.s32.totalorder %v419, %v563
    %vm684 = vcmp.eq.s32.totalorder %v419, %v577
    %vm685 = vcmp.eq.s32.totalorder %v419, %v591
    %vm686 = vcmp.eq.s32.totalorder %v419, %v605
    %vm687 = vcmp.eq.s32.totalorder %v419, %v619
    %vm688 = vcmp.eq.s32.totalorder %v419, %v633
    %vm689 = vcmp.eq.s32.totalorder %v419, %v647
    %vm690 = vcmp.eq.s32.totalorder %v419, %v661
    %vm691 = vcmp.eq.s32.totalorder %v419, %v675
    %v692 = vsel %vm676, 1, 0
    %v693 = vsel %vm677, 1, 0
    %v694 = vsel %vm678, 1, 0
    %v695 = vsel %vm679, 1, 0
    %v696 = vsel %vm680, 1, 0
    %v697 = vsel %vm681, 1, 0
    %v698 = vsel %vm682, 1, 0
    %v699 = vsel %vm683, 1, 0
    %v700 = vsel %vm684, 1, 0
    %v701 = vsel %vm685, 1, 0
    %v702 = vsel %vm686, 1, 0
    %v703 = vsel %vm687, 1, 0
    %v704 = vsel %vm688, 1, 0
    %v705 = vsel %vm689, 1, 0
    %v706 = vsel %vm690, 1, 0
    %v707 = vsel %vm691, 1, 0
    %v708 = vcvt.s32.f32 %v692
    %v709 = vcvt.s32.f32 %v693
    %v710 = vcvt.s32.f32 %v694
    %v711 = vcvt.s32.f32 %v695
    %v712 = vcvt.s32.f32 %v696
    %v713 = vcvt.s32.f32 %v697
    %v714 = vcvt.s32.f32 %v698
    %v715 = vcvt.s32.f32 %v699
    %v716 = vcvt.s32.f32 %v700
    %v717 = vcvt.s32.f32 %v701
    %v718 = vcvt.s32.f32 %v702
    %v719 = vcvt.s32.f32 %v703
    %v720 = vcvt.s32.f32 %v704
    %v721 = vcvt.s32.f32 %v705
    %v722 = vcvt.s32.f32 %v706
    %v723 = vcvt.s32.f32 %v707
    %724 = vmatprep.subr.mxu0 0.0
    %725 = vmatpush1.msra.mxu0 %v105
    %726 = vmatprep.subr.mxu0 0.0
    %727 = vmatpush1.msra.mxu0 %v106
    %728 = vmatprep.subr.mxu0 0.0
    %729 = vmatpush1.msra.mxu0 %v107
    %730 = vmatprep.subr.mxu0 0.0
    %731 = vmatpush1.msra.mxu0 %v108
    %732 = vmatprep.subr.mxu0 0.0
    %733 = vmatpush1.msra.mxu0 %v109
    %734 = vmatprep.subr.mxu0 0.0
    %735 = vmatpush1.msra.mxu0 %v110
    %736 = vmatprep.subr.mxu0 0.0
    %737 = vmatpush1.msra.mxu0 %v111
    %738 = vmatprep.subr.mxu0 0.0
    %739 = vmatpush1.msra.mxu0 %v112
    %740 = vmatprep.subr.mxu0 0.0
    %741 = vmatpush1.msra.mxu0 %v113
    %742 = vmatprep.subr.mxu0 0.0
    %743 = vmatpush1.msra.mxu0 %v114
    %744 = vmatprep.subr.mxu0 0.0
    %745 = vmatpush1.msra.mxu0 %v115
    %746 = vmatprep.subr.mxu0 0.0
    %747 = vmatpush1.msra.mxu0 %v116
    %748 = vmatprep.subr.mxu0 0.0
    %749 = vmatpush1.msra.mxu0 %v117
    %750 = vmatprep.subr.mxu0 0.0
    %751 = vmatpush1.msra.mxu0 %v118
    %752 = vmatprep.subr.mxu0 0.0
    %753 = vmatpush1.msra.mxu0 %v119
    %754 = vmatprep.subr.mxu0 0.0
    %755 = vmatpush1.msra.mxu0 %v120
    %756 = vmatprep.subr.mxu0 0.0
    %757 = vmatpush1.msra.mxu0 0.0
    %758 = vmatprep.subr.mxu0 0.0
    %759 = vmatpush1.msra.mxu0 0.0
    %760 = vmatprep.subr.mxu0 0.0
    %761 = vmatpush1.msra.mxu0 0.0
    %762 = vmatprep.subr.mxu0 0.0
    %763 = vmatpush1.msra.mxu0 0.0
    %764 = vmatprep.subr.mxu0 0.0
    %765 = vmatpush1.msra.mxu0 0.0
    %766 = vmatprep.subr.mxu0 0.0
    %767 = vmatpush1.msra.mxu0 0.0
    %768 = vmatprep.subr.mxu0 0.0
    %769 = vmatpush1.msra.mxu0 0.0
    %770 = vmatprep.subr.mxu0 0.0
    %771 = vmatpush1.msra.mxu0 0.0
    %772 = vmatprep.subr.mxu0 0.0
    %773 = vmatpush1.msra.mxu0 0.0
    %774 = vmatprep.subr.mxu0 0.0
    %775 = vmatpush1.msra.mxu0 0.0
    %776 = vmatprep.subr.mxu0 0.0
    %777 = vmatpush1.msra.mxu0 0.0
    %778 = vmatprep.subr.mxu0 0.0
    %779 = vmatpush1.msra.mxu0 0.0
    %780 = vmatprep.subr.mxu0 0.0
    %781 = vmatpush1.msra.mxu0 0.0
    %782 = vmatprep.subr.mxu0 0.0
    %783 = vmatpush1.msra.mxu0 0.0
    %784 = vmatprep.subr.mxu0 0.0
    %785 = vmatpush1.msra.mxu0 0.0
    %786 = vmatprep.subr.mxu0 0.0
    %787 = vmatpush1.msra.mxu0 0.0
    %788 = vmatprep.mubr.f32.mxu0 0.0
    %789 = vmatmul.mubr.f32.gmra.mrb[0].mxu0 %v708
    %v790 = vpop.f32.mrb[0].mxu0
    %v791 = vadd.f32 0.0, %v790
    %v792 = vpop.f32.mrb[0].mxu0
    %793 = vmatprep.mubr.f32.mxu0 0.0
    %794 = vmatmul.mubr.f32.gmra.mrb[0].mxu0 %v709
    %v795 = vpop.f32.mrb[0].mxu0
    %v796 = vadd.f32 0.0, %v795
    %v797 = vpop.f32.mrb[0].mxu0
    %798 = vmatprep.mubr.f32.mxu0 0.0
    %799 = vmatmul.mubr.f32.gmra.mrb[0].mxu0 %v710
    %v800 = vpop.f32.mrb[0].mxu0
    %v801 = vadd.f32 0.0, %v800
    %v802 = vpop.f32.mrb[0].mxu0
    %803 = vmatprep.mubr.f32.mxu0 0.0
    %804 = vmatmul.mubr.f32.gmra.mrb[0].mxu0 %v711
    %v805 = vpop.f32.mrb[0].mxu0
    %v806 = vadd.f32 0.0, %v805
    %v807 = vpop.f32.mrb[0].mxu0
    %808 = vmatprep.mubr.f32.mxu0 0.0
    %809 = vmatmul.mubr.f32.gmra.mrb[0].mxu0 %v712
    %v810 = vpop.f32.mrb[0].mxu0
    %v811 = vadd.f32 0.0, %v810
    %v812 = vpop.f32.mrb[0].mxu0
    %813 = vmatprep.mubr.f32.mxu0 0.0
    %814 = vmatmul.mubr.f32.gmra.mrb[0].mxu0 %v713
    %v815 = vpop.f32.mrb[0].mxu0
    %v816 = vadd.f32 0.0, %v815
    %v817 = vpop.f32.mrb[0].mxu0
    %818 = vmatprep.mubr.f32.mxu0 0.0
    %819 = vmatmul.mubr.f32.gmra.mrb[0].mxu0 %v714
    %v820 = vpop.f32.mrb[0].mxu0
    %v821 = vadd.f32 0.0, %v820
    %v822 = vpop.f32.mrb[0].mxu0
    %823 = vmatprep.mubr.f32.mxu0 0.0
    %824 = vmatmul.mubr.f32.gmra.mrb[0].mxu0 %v715
    %v825 = vpop.f32.mrb[0].mxu0
    %v826 = vadd.f32 0.0, %v825
    %v827 = vpop.f32.mrb[0].mxu0
    %828 = vmatprep.mubr.f32.mxu0 0.0
    %829 = vmatmul.mubr.f32.gmra.mrb[0].mxu0 %v716
    %v830 = vpop.f32.mrb[0].mxu0
    %v831 = vadd.f32 0.0, %v830
    %v832 = vpop.f32.mrb[0].mxu0
    %833 = vmatprep.mubr.f32.mxu0 0.0
    %834 = vmatmul.mubr.f32.gmra.mrb[0].mxu0 %v717
    %v835 = vpop.f32.mrb[0].mxu0
    %v836 = vadd.f32 0.0, %v835
    %v837 = vpop.f32.mrb[0].mxu0
    %838 = vmatprep.mubr.f32.mxu0 0.0
    %839 = vmatmul.mubr.f32.gmra.mrb[0].mxu0 %v718
    %v840 = vpop.f32.mrb[0].mxu0
    %v841 = vadd.f32 0.0, %v840
    %v842 = vpop.f32.mrb[0].mxu0
    %843 = vmatprep.mubr.f32.mxu0 0.0
    %844 = vmatmul.mubr.f32.gmra.mrb[0].mxu0 %v719
    %v845 = vpop.f32.mrb[0].mxu0
    %v846 = vadd.f32 0.0, %v845
    %v847 = vpop.f32.mrb[0].mxu0
    %848 = vmatprep.mubr.f32.mxu0 0.0
    %849 = vmatmul.mubr.f32.gmra.mrb[0].mxu0 %v720
    %v850 = vpop.f32.mrb[0].mxu0
    %v851 = vadd.f32 0.0, %v850
    %v852 = vpop.f32.mrb[0].mxu0
    %853 = vmatprep.mubr.f32.mxu0 0.0
    %854 = vmatmul.mubr.f32.gmra.mrb[0].mxu0 %v721
    %v855 = vpop.f32.mrb[0].mxu0
    %v856 = vadd.f32 0.0, %v855
    %v857 = vpop.f32.mrb[0].mxu0
    %858 = vmatprep.mubr.f32.mxu0 0.0
    %859 = vmatmul.mubr.f32.gmra.mrb[0].mxu0 %v722
    %v860 = vpop.f32.mrb[0].mxu0
    %v861 = vadd.f32 0.0, %v860
    %v862 = vpop.f32.mrb[0].mxu0
    %863 = vmatprep.mubr.f32.mxu0 0.0
    %864 = vmatmul.mubr.f32.gmra.mrb[0].mxu0 %v723
    %v865 = vpop.f32.mrb[0].mxu0
    %v866 = vadd.f32 0.0, %v865
    %v867 = vpop.f32.mrb[0].mxu0
    %868 = vdwg.mxu0
    %869 = vst.msk [vmem:[%s57] sm:$0xff] %vm122, %v791
    %870 = vst.msk [vmem:[%s57 + $0x8] sm:$0xff] %vm122, %v796
    %871 = vst.msk [vmem:[%s57 + $0x10] sm:$0xff] %vm122, %v801
    %872 = vst.msk [vmem:[%s57 + $0x18] sm:$0xff] %vm122, %v806
    %873 = vst.msk [vmem:[%s57 + $0x20] sm:$0xff] %vm122, %v811
    %874 = vst.msk [vmem:[%s57 + $0x28] sm:$0xff] %vm122, %v816
    %875 = vst.msk [vmem:[%s57 + $0x30] sm:$0xff] %vm122, %v821
    %876 = vst.msk [vmem:[%s57 + $0x38] sm:$0xff] %vm122, %v826
    %877 = vst.msk [vmem:[%s57 + $0x40] sm:$0xff] %vm122, %v831
    %878 = vst.msk [vmem:[%s57 + $0x48] sm:$0xff] %vm122, %v836
    %879 = vst.msk [vmem:[%s57 + $0x50] sm:$0xff] %vm122, %v841
    %880 = vst.msk [vmem:[%s57 + $0x58] sm:$0xff] %vm122, %v846
    %881 = vst.msk [vmem:[%s57 + $0x60] sm:$0xff] %vm122, %v851
    %882 = vst.msk [vmem:[%s57 + $0x68] sm:$0xff] %vm122, %v856
    %883 = vst.msk [vmem:[%s57 + $0x70] sm:$0xff] %vm122, %v861
    %884 = vst.msk [vmem:[%s57 + $0x78] sm:$0xff] %vm122, %v866
    %v885 = vcvt.s32.f32 %v419
    %886 = vmatprep.subr.mxu0 0.0
    %887 = vmatpush1.xpose.msra.mxu0 %v708
    %888 = vmatprep.subr.mxu0 0.0
    %889 = vmatpush1.xpose.msra.mxu0 %v709
    %890 = vmatprep.subr.mxu0 0.0
    %891 = vmatpush1.xpose.msra.mxu0 %v710
    %892 = vmatprep.subr.mxu0 0.0
    %893 = vmatpush1.xpose.msra.mxu0 %v711
    %894 = vmatprep.subr.mxu0 0.0
    %895 = vmatpush1.xpose.msra.mxu0 %v712
    %896 = vmatprep.subr.mxu0 0.0
    %897 = vmatpush1.xpose.msra.mxu0 %v713
    %898 = vmatprep.subr.mxu0 0.0
    %899 = vmatpush1.xpose.msra.mxu0 %v714
    %900 = vmatprep.subr.mxu0 0.0
    %901 = vmatpush1.xpose.msra.mxu0 %v715
    %902 = vmatprep.subr.mxu0 0.0
    %903 = vmatpush1.xpose.msra.mxu0 %v716
    %904 = vmatprep.subr.mxu0 0.0
    %905 = vmatpush1.xpose.msra.mxu0 %v717
    %906 = vmatprep.subr.mxu0 0.0
    %907 = vmatpush1.xpose.msra.mxu0 %v718
    %908 = vmatprep.subr.mxu0 0.0
    %909 = vmatpush1.xpose.msra.mxu0 %v719
    %910 = vmatprep.subr.mxu0 0.0
    %911 = vmatpush1.xpose.msra.mxu0 %v720
    %912 = vmatprep.subr.mxu0 0.0
    %913 = vmatpush1.xpose.msra.mxu0 %v721
    %914 = vmatprep.subr.mxu0 0.0
    %915 = vmatpush1.xpose.msra.mxu0 %v722
    %916 = vmatprep.subr.mxu0 0.0
    %917 = vmatpush1.xpose.msra.mxu0 %v723
    %918 = vmatprep.subr.mxu0 0.0
    %919 = vmatpush1.xpose.msra.mxu0 0.0
    %920 = vmatprep.subr.mxu0 0.0
    %921 = vmatpush1.xpose.msra.mxu0 0.0
    %922 = vmatprep.subr.mxu0 0.0
    %923 = vmatpush1.xpose.msra.mxu0 0.0
    %924 = vmatprep.subr.mxu0 0.0
    %925 = vmatpush1.xpose.msra.mxu0 0.0
    %926 = vmatprep.subr.mxu0 0.0
    %927 = vmatpush1.xpose.msra.mxu0 0.0
    %928 = vmatprep.subr.mxu0 0.0
    %929 = vmatpush1.xpose.msra.mxu0 0.0
    %930 = vmatprep.subr.mxu0 0.0
    %931 = vmatpush1.xpose.msra.mxu0 0.0
    %932 = vmatprep.subr.mxu0 0.0
    %933 = vmatpush1.xpose.msra.mxu0 0.0
    %934 = vmatprep.subr.mxu0 0.0
    %935 = vmatpush1.xpose.msra.mxu0 0.0
    %936 = vmatprep.subr.mxu0 0.0
    %937 = vmatpush1.xpose.msra.mxu0 0.0
    %938 = vmatprep.subr.mxu0 0.0
    %939 = vmatpush1.xpose.msra.mxu0 0.0
    %940 = vmatprep.subr.mxu0 0.0
    %941 = vmatpush1.xpose.msra.mxu0 0.0
    %942 = vmatprep.subr.mxu0 0.0
    %943 = vmatpush1.xpose.msra.mxu0 0.0
    %944 = vmatprep.subr.mxu0 0.0
    %945 = vmatpush1.xpose.msra.mxu0 0.0
    %946 = vmatprep.subr.mxu0 0.0
    %947 = vmatpush1.xpose.msra.mxu0 0.0
    %948 = vmatprep.subr.mxu0 0.0
    %949 = vmatpush1.xpose.msra.mxu0 0.0
    %950 = vmatprep.mubr.f32.mxu0 0.0
    %951 = vmatmul.mubr.f32.gmra.mrb[0].mxu0 %v885
    %v952 = vpop.f32.mrb[0].mxu0
    %v953 = vadd.f32 0.0, %v952
    %v954 = vpop.f32.mrb[0].mxu0
    %955 = vdwg.mxu0
    %v956 = vcvt.f32.s32.to.zero.pseudo %v953
    %957 = vst [vmem:[%s63] sm:$0x1] %v956
    %v958 = vsub.f32 %v791, %v89
    %v959 = vsub.f32 %v796, %v90
    %v960 = vsub.f32 %v801, %v91
    %v961 = vsub.f32 %v806, %v92
    %v962 = vsub.f32 %v811, %v93
    %v963 = vsub.f32 %v816, %v94
    %v964 = vsub.f32 %v821, %v95
    %v965 = vsub.f32 %v826, %v96
    %v966 = vsub.f32 %v831, %v97
    %v967 = vsub.f32 %v836, %v98
    %v968 = vsub.f32 %v841, %v99
    %v969 = vsub.f32 %v846, %v100
    %v970 = vsub.f32 %v851, %v101
    %v971 = vsub.f32 %v856, %v102
    %v972 = vsub.f32 %v861, %v103
    %v973 = vsub.f32 %v866, %v104
    %v974 = vmul.f32 %v958, %v958
    %v975 = vmul.f32 %v959, %v959
    %v976 = vmul.f32 %v960, %v960
    %v977 = vmul.f32 %v961, %v961
    %v978 = vmul.f32 %v962, %v962
    %v979 = vmul.f32 %v963, %v963
    %v980 = vmul.f32 %v964, %v964
    %v981 = vmul.f32 %v965, %v965
    %v982 = vmul.f32 %v966, %v966
    %v983 = vmul.f32 %v967, %v967
    %v984 = vmul.f32 %v968, %v968
    %v985 = vmul.f32 %v969, %v969
    %v986 = vmul.f32 %v970, %v970
    %v987 = vmul.f32 %v971, %v971
    %v988 = vmul.f32 %v972, %v972
    %v989 = vmul.f32 %v973, %v973
    %v990 = vsel %vm122, %v974, 0.0
    %991 = vadd.xlane.f32.xlu0 %v990
    %v992 = vpop.xlane.xlu0 %991
    %v993 = vsel %vm122, %v975, 0.0
    %994 = vadd.xlane.f32.xlu0 %v993
    %v995 = vpop.xlane.xlu0 %994
    %v996 = vsel %vm122, %v976, 0.0
    %997 = vadd.xlane.f32.xlu0 %v996
    %v998 = vpop.xlane.xlu0 %997
    %v999 = vsel %vm122, %v977, 0.0
    %1000 = vadd.xlane.f32.xlu0 %v999
    %v1001 = vpop.xlane.xlu0 %1000
    %v1002 = vsel %vm122, %v978, 0.0
    %1003 = vadd.xlane.f32.xlu0 %v1002
    %v1004 = vpop.xlane.xlu0 %1003
    %v1005 = vsel %vm122, %v979, 0.0
    %1006 = vadd.xlane.f32.xlu0 %v1005
    %v1007 = vpop.xlane.xlu0 %1006
    %v1008 = vsel %vm122, %v980, 0.0
    %1009 = vadd.xlane.f32.xlu0 %v1008
    %v1010 = vpop.xlane.xlu0 %1009
    %v1011 = vsel %vm122, %v981, 0.0
    %1012 = vadd.xlane.f32.xlu0 %v1011
    %v1013 = vpop.xlane.xlu0 %1012
    %v1014 = vsel %vm122, %v982, 0.0
    %1015 = vadd.xlane.f32.xlu0 %v1014
    %v1016 = vpop.xlane.xlu0 %1015
    %v1017 = vsel %vm122, %v983, 0.0
    %1018 = vadd.xlane.f32.xlu0 %v1017
    %v1019 = vpop.xlane.xlu0 %1018
    %v1020 = vsel %vm122, %v984, 0.0
    %1021 = vadd.xlane.f32.xlu0 %v1020
    %v1022 = vpop.xlane.xlu0 %1021
    %v1023 = vsel %vm122, %v985, 0.0
    %1024 = vadd.xlane.f32.xlu0 %v1023
    %v1025 = vpop.xlane.xlu0 %1024
    %v1026 = vsel %vm122, %v986, 0.0
    %1027 = vadd.xlane.f32.xlu0 %v1026
    %v1028 = vpop.xlane.xlu0 %1027
    %v1029 = vsel %vm122, %v987, 0.0
    %1030 = vadd.xlane.f32.xlu0 %v1029
    %v1031 = vpop.xlane.xlu0 %1030
    %v1032 = vsel %vm122, %v988, 0.0
    %1033 = vadd.xlane.f32.xlu0 %v1032
    %v1034 = vpop.xlane.xlu0 %1033
    %v1035 = vsel %vm122, %v989, 0.0
    %1036 = vadd.xlane.f32.xlu0 %v1035
    %v1037 = vpop.xlane.xlu0 %1036
    %v1038 = vld [vmem:[%s5] sm:$0xff]
    %v1039 = vld [vmem:[%s5 + $0x8] sm:$0xff]
    %v1040 = vld [vmem:[%s5 + $0x10] sm:$0xff]
    %v1041 = vld [vmem:[%s5 + $0x18] sm:$0xff]
    %v1042 = vld [vmem:[%s5 + $0x20] sm:$0xff]
    %v1043 = vld [vmem:[%s5 + $0x28] sm:$0xff]
    %v1044 = vld [vmem:[%s5 + $0x30] sm:$0xff]
    %v1045 = vld [vmem:[%s5 + $0x38] sm:$0xff]
    %v1046 = vld [vmem:[%s5 + $0x40] sm:$0xff]
    %v1047 = vld [vmem:[%s5 + $0x48] sm:$0xff]
    %v1048 = vld [vmem:[%s5 + $0x50] sm:$0xff]
    %v1049 = vld [vmem:[%s5 + $0x58] sm:$0xff]
    %v1050 = vld [vmem:[%s5 + $0x60] sm:$0xff]
    %v1051 = vld [vmem:[%s5 + $0x68] sm:$0xff]
    %v1052 = vld [vmem:[%s5 + $0x70] sm:$0xff]
    %v1053 = vld [vmem:[%s5 + $0x78] sm:$0xff]
    %1054 = vxpose.xlu0.b32.start [1/16] %v708, 128
    %1055 = vxpose.xlu0.b32.cont [2/16] %v709, 128
    %1056 = vxpose.xlu0.b32.cont [3/16] %v710, 128
    %1057 = vxpose.xlu0.b32.cont [4/16] %v711, 128
    %1058 = vxpose.xlu0.b32.cont [5/16] %v712, 128
    %1059 = vxpose.xlu0.b32.cont [6/16] %v713, 128
    %1060 = vxpose.xlu0.b32.cont [7/16] %v714, 128
    %1061 = vxpose.xlu0.b32.cont [8/16] %v715, 128
    %1062 = vxpose.xlu0.b32.cont [9/16] %v716, 128
    %1063 = vxpose.xlu0.b32.cont [10/16] %v717, 128
    %1064 = vxpose.xlu0.b32.cont [11/16] %v718, 128
    %1065 = vxpose.xlu0.b32.cont [12/16] %v719, 128
    %1066 = vxpose.xlu0.b32.cont [13/16] %v720, 128
    %1067 = vxpose.xlu0.b32.cont [14/16] %v721, 128
    %1068 = vxpose.xlu0.b32.cont [15/16] %v722, 128
    %1069 = vxpose.xlu0.b32.end [16/16] %v723, 128
    %v1070 = vpop.trf.xlu0
    %v1071 = vpop.trf.xlu0
    %v1072 = vpop.trf.xlu0
    %v1073 = vpop.trf.xlu0
    %v1074 = vpop.trf.xlu0
    %v1075 = vpop.trf.xlu0
    %v1076 = vpop.trf.xlu0
    %v1077 = vpop.trf.xlu0
    %v1078 = vpop.trf.xlu0
    %v1079 = vpop.trf.xlu0
    %v1080 = vpop.trf.xlu0
    %v1081 = vpop.trf.xlu0
    %v1082 = vpop.trf.xlu0
    %v1083 = vpop.trf.xlu0
    %v1084 = vpop.trf.xlu0
    %v1085 = vpop.trf.xlu0
    %1086 = vmatprep.subr.mxu0 0.0
    %1087 = vmatpush1.msra.mxu0 %v89
    %1088 = vmatprep.subr.mxu0 0.0
    %1089 = vmatpush1.msra.mxu0 %v90
    %1090 = vmatprep.subr.mxu0 0.0
    %1091 = vmatpush1.msra.mxu0 %v91
    %1092 = vmatprep.subr.mxu0 0.0
    %1093 = vmatpush1.msra.mxu0 %v92
    %1094 = vmatprep.subr.mxu0 0.0
    %1095 = vmatpush1.msra.mxu0 %v93
    %1096 = vmatprep.subr.mxu0 0.0
    %1097 = vmatpush1.msra.mxu0 %v94
    %1098 = vmatprep.subr.mxu0 0.0
    %1099 = vmatpush1.msra.mxu0 %v95
    %1100 = vmatprep.subr.mxu0 0.0
    %1101 = vmatpush1.msra.mxu0 %v96
    %1102 = vmatprep.subr.mxu0 0.0
    %1103 = vmatpush1.msra.mxu0 %v97
    %1104 = vmatprep.subr.mxu0 0.0
    %1105 = vmatpush1.msra.mxu0 %v98
    %1106 = vmatprep.subr.mxu0 0.0
    %1107 = vmatpush1.msra.mxu0 %v99
    %1108 = vmatprep.subr.mxu0 0.0
    %1109 = vmatpush1.msra.mxu0 %v100
    %1110 = vmatprep.subr.mxu0 0.0
    %1111 = vmatpush1.msra.mxu0 %v101
    %1112 = vmatprep.subr.mxu0 0.0
    %1113 = vmatpush1.msra.mxu0 %v102
    %1114 = vmatprep.subr.mxu0 0.0
    %1115 = vmatpush1.msra.mxu0 %v103
    %1116 = vmatprep.subr.mxu0 0.0
    %1117 = vmatpush1.msra.mxu0 %v104
    %1118 = vmatprep.subr.mxu0 0.0
    %1119 = vmatpush1.msra.mxu0 0.0
    %1120 = vmatprep.subr.mxu0 0.0
    %1121 = vmatpush1.msra.mxu0 0.0
    %1122 = vmatprep.subr.mxu0 0.0
    %1123 = vmatpush1.msra.mxu0 0.0
    %1124 = vmatprep.subr.mxu0 0.0
    %1125 = vmatpush1.msra.mxu0 0.0
    %1126 = vmatprep.subr.mxu0 0.0
    %1127 = vmatpush1.msra.mxu0 0.0
    %1128 = vmatprep.subr.mxu0 0.0
    %1129 = vmatpush1.msra.mxu0 0.0
    %1130 = vmatprep.subr.mxu0 0.0
    %1131 = vmatpush1.msra.mxu0 0.0
    %1132 = vmatprep.subr.mxu0 0.0
    %1133 = vmatpush1.msra.mxu0 0.0
    %1134 = vmatprep.subr.mxu0 0.0
    %1135 = vmatpush1.msra.mxu0 0.0
    %1136 = vmatprep.subr.mxu0 0.0
    %1137 = vmatpush1.msra.mxu0 0.0
    %1138 = vmatprep.subr.mxu0 0.0
    %1139 = vmatpush1.msra.mxu0 0.0
    %1140 = vmatprep.subr.mxu0 0.0
    %1141 = vmatpush1.msra.mxu0 0.0
    %1142 = vmatprep.subr.mxu0 0.0
    %1143 = vmatpush1.msra.mxu0 0.0
    %1144 = vmatprep.subr.mxu0 0.0
    %1145 = vmatpush1.msra.mxu0 0.0
    %1146 = vmatprep.subr.mxu0 0.0
    %1147 = vmatpush1.msra.mxu0 0.0
    %1148 = vmatprep.subr.mxu0 0.0
    %1149 = vmatpush1.msra.mxu0 0.0
    %1150 = vmatprep.mubr.f32.mxu0 0.0
    %1151 = vmatmul.mubr.f32.gmra.mrb[0].mxu0 %v1070
    %v1152 = vpop.f32.mrb[0].mxu0
    %v1153 = vadd.f32 0.0, %v1152
    %v1154 = vpop.f32.mrb[0].mxu0
    %1155 = vmatprep.mubr.f32.mxu0 0.0
    %1156 = vmatmul.mubr.f32.gmra.mrb[0].mxu0 %v1071
    %v1157 = vpop.f32.mrb[0].mxu0
    %v1158 = vadd.f32 0.0, %v1157
    %v1159 = vpop.f32.mrb[0].mxu0
    %1160 = vmatprep.mubr.f32.mxu0 0.0
    %1161 = vmatmul.mubr.f32.gmra.mrb[0].mxu0 %v1072
    %v1162 = vpop.f32.mrb[0].mxu0
    %v1163 = vadd.f32 0.0, %v1162
    %v1164 = vpop.f32.mrb[0].mxu0
    %1165 = vmatprep.mubr.f32.mxu0 0.0
    %1166 = vmatmul.mubr.f32.gmra.mrb[0].mxu0 %v1073
    %v1167 = vpop.f32.mrb[0].mxu0
    %v1168 = vadd.f32 0.0, %v1167
    %v1169 = vpop.f32.mrb[0].mxu0
    %1170 = vmatprep.mubr.f32.mxu0 0.0
    %1171 = vmatmul.mubr.f32.gmra.mrb[0].mxu0 %v1074
    %v1172 = vpop.f32.mrb[0].mxu0
    %v1173 = vadd.f32 0.0, %v1172
    %v1174 = vpop.f32.mrb[0].mxu0
    %1175 = vmatprep.mubr.f32.mxu0 0.0
    %1176 = vmatmul.mubr.f32.gmra.mrb[0].mxu0 %v1075
    %v1177 = vpop.f32.mrb[0].mxu0
    %v1178 = vadd.f32 0.0, %v1177
    %v1179 = vpop.f32.mrb[0].mxu0
    %1180 = vmatprep.mubr.f32.mxu0 0.0
    %1181 = vmatmul.mubr.f32.gmra.mrb[0].mxu0 %v1076
    %v1182 = vpop.f32.mrb[0].mxu0
    %v1183 = vadd.f32 0.0, %v1182
    %v1184 = vpop.f32.mrb[0].mxu0
    %1185 = vmatprep.mubr.f32.mxu0 0.0
    %1186 = vmatmul.mubr.f32.gmra.mrb[0].mxu0 %v1077
    %v1187 = vpop.f32.mrb[0].mxu0
    %v1188 = vadd.f32 0.0, %v1187
    %v1189 = vpop.f32.mrb[0].mxu0
    %1190 = vmatprep.mubr.f32.mxu0 0.0
    %1191 = vmatmul.mubr.f32.gmra.mrb[0].mxu0 %v1078
    %v1192 = vpop.f32.mrb[0].mxu0
    %v1193 = vadd.f32 0.0, %v1192
    %v1194 = vpop.f32.mrb[0].mxu0
    %1195 = vmatprep.mubr.f32.mxu0 0.0
    %1196 = vmatmul.mubr.f32.gmra.mrb[0].mxu0 %v1079
    %v1197 = vpop.f32.mrb[0].mxu0
    %v1198 = vadd.f32 0.0, %v1197
    %v1199 = vpop.f32.mrb[0].mxu0
    %1200 = vmatprep.mubr.f32.mxu0 0.0
    %1201 = vmatmul.mubr.f32.gmra.mrb[0].mxu0 %v1080
    %v1202 = vpop.f32.mrb[0].mxu0
    %v1203 = vadd.f32 0.0, %v1202
    %v1204 = vpop.f32.mrb[0].mxu0
    %1205 = vmatprep.mubr.f32.mxu0 0.0
    %1206 = vmatmul.mubr.f32.gmra.mrb[0].mxu0 %v1081
    %v1207 = vpop.f32.mrb[0].mxu0
    %v1208 = vadd.f32 0.0, %v1207
    %v1209 = vpop.f32.mrb[0].mxu0
    %1210 = vmatprep.mubr.f32.mxu0 0.0
    %1211 = vmatmul.mubr.f32.gmra.mrb[0].mxu0 %v1082
    %v1212 = vpop.f32.mrb[0].mxu0
    %v1213 = vadd.f32 0.0, %v1212
    %v1214 = vpop.f32.mrb[0].mxu0
    %1215 = vmatprep.mubr.f32.mxu0 0.0
    %1216 = vmatmul.mubr.f32.gmra.mrb[0].mxu0 %v1083
    %v1217 = vpop.f32.mrb[0].mxu0
    %v1218 = vadd.f32 0.0, %v1217
    %v1219 = vpop.f32.mrb[0].mxu0
    %1220 = vmatprep.mubr.f32.mxu0 0.0
    %1221 = vmatmul.mubr.f32.gmra.mrb[0].mxu0 %v1084
    %v1222 = vpop.f32.mrb[0].mxu0
    %v1223 = vadd.f32 0.0, %v1222
    %v1224 = vpop.f32.mrb[0].mxu0
    %1225 = vmatprep.mubr.f32.mxu0 0.0
    %1226 = vmatmul.mubr.f32.gmra.mrb[0].mxu0 %v1085
    %v1227 = vpop.f32.mrb[0].mxu0
    %v1228 = vadd.f32 0.0, %v1227
    %v1229 = vpop.f32.mrb[0].mxu0
    %1230 = vdwg.mxu0
    %v1231 = vadd.f32 %v1038, %v1153
    %v1232 = vadd.f32 %v1039, %v1158
    %v1233 = vadd.f32 %v1040, %v1163
    %v1234 = vadd.f32 %v1041, %v1168
    %v1235 = vadd.f32 %v1042, %v1173
    %v1236 = vadd.f32 %v1043, %v1178
    %v1237 = vadd.f32 %v1044, %v1183
    %v1238 = vadd.f32 %v1045, %v1188
    %v1239 = vadd.f32 %v1046, %v1193
    %v1240 = vadd.f32 %v1047, %v1198
    %v1241 = vadd.f32 %v1048, %v1203
    %v1242 = vadd.f32 %v1049, %v1208
    %v1243 = vadd.f32 %v1050, %v1213
    %v1244 = vadd.f32 %v1051, %v1218
    %v1245 = vadd.f32 %v1052, %v1223
    %v1246 = vadd.f32 %v1053, %v1228
    %1247 = vst.msk [vmem:[%s5] sm:$0xff] %vm122, %v1231
    %1248 = vst.msk [vmem:[%s5 + $0x8] sm:$0xff] %vm122, %v1232
    %1249 = vst.msk [vmem:[%s5 + $0x10] sm:$0xff] %vm122, %v1233
    %1250 = vst.msk [vmem:[%s5 + $0x18] sm:$0xff] %vm122, %v1234
    %1251 = vst.msk [vmem:[%s5 + $0x20] sm:$0xff] %vm122, %v1235
    %1252 = vst.msk [vmem:[%s5 + $0x28] sm:$0xff] %vm122, %v1236
    %1253 = vst.msk [vmem:[%s5 + $0x30] sm:$0xff] %vm122, %v1237
    %1254 = vst.msk [vmem:[%s5 + $0x38] sm:$0xff] %vm122, %v1238
    %1255 = vst.msk [vmem:[%s5 + $0x40] sm:$0xff] %vm122, %v1239
    %1256 = vst.msk [vmem:[%s5 + $0x48] sm:$0xff] %vm122, %v1240
    %1257 = vst.msk [vmem:[%s5 + $0x50] sm:$0xff] %vm122, %v1241
    %1258 = vst.msk [vmem:[%s5 + $0x58] sm:$0xff] %vm122, %v1242
    %1259 = vst.msk [vmem:[%s5 + $0x60] sm:$0xff] %vm122, %v1243
    %1260 = vst.msk [vmem:[%s5 + $0x68] sm:$0xff] %vm122, %v1244
    %1261 = vst.msk [vmem:[%s5 + $0x70] sm:$0xff] %vm122, %v1245
    %1262 = vst.msk [vmem:[%s5 + $0x78] sm:$0xff] %vm122, %v1246
    %v1263 = vld [vmem:[%s6] sm:$0x1]
    %v1264 = vadd.f32 %v708, %v709
    %v1265 = vadd.f32 %v1264, %v710
    %v1266 = vadd.f32 %v1265, %v711
    %v1267 = vadd.f32 %v1266, %v712
    %v1268 = vadd.f32 %v1267, %v713
    %v1269 = vadd.f32 %v1268, %v714
    %v1270 = vadd.f32 %v1269, %v715
    %v1271 = vadd.f32 %v1270, %v716
    %v1272 = vadd.f32 %v1271, %v717
    %v1273 = vadd.f32 %v1272, %v718
    %v1274 = vadd.f32 %v1273, %v719
    %v1275 = vadd.f32 %v1274, %v720
    %v1276 = vadd.f32 %v1275, %v721
    %v1277 = vadd.f32 %v1276, %v722
    %v1278 = vadd.f32 %v1277, %v723
    %v1279 = vrot.slane %v1278, 4
    %v1280 = vadd.f32 %v1278, %v1279
    %v1281 = vrot.slane %v1280, 2
    %v1282 = vadd.f32 %v1280, %v1281
    %v1283 = vrot.slane %v1282, 1
    %v1284 = vadd.f32 %v1282, %v1283
    %v1285 = vadd.f32 %v1263, %v1284
    %1286 = vst [vmem:[%s6] sm:$0x1] %v1285
    %v1287 = vld [vmem:[#allocation2] sm:$0x1]
    %v1288 = vadd.f32 %v992, %v995
    %v1289 = vadd.f32 %v1288, %v998
    %v1290 = vadd.f32 %v1289, %v1001
    %v1291 = vadd.f32 %v1290, %v1004
    %v1292 = vadd.f32 %v1291, %v1007
    %v1293 = vadd.f32 %v1292, %v1010
    %v1294 = vadd.f32 %v1293, %v1013
    %v1295 = vadd.f32 %v1294, %v1016
    %v1296 = vadd.f32 %v1295, %v1019
    %v1297 = vadd.f32 %v1296, %v1022
    %v1298 = vadd.f32 %v1297, %v1025
    %v1299 = vadd.f32 %v1298, %v1028
    %v1300 = vadd.f32 %v1299, %v1031
    %v1301 = vadd.f32 %v1300, %v1034
    %v1302 = vadd.f32 %v1301, %v1037
    %v1303 = vrot.slane %v1302, 4
    %v1304 = vadd.f32 %v1302, %v1303
    %v1305 = vrot.slane %v1304, 2
    %v1306 = vadd.f32 %v1304, %v1305
    %v1307 = vrot.slane %v1306, 1
    %v1308 = vadd.f32 %v1306, %v1307
    %v1309 = vadd.f32 %v1287, %v1308
    %vm1310 = vcmask 0
    %1311 = vst.msk [vmem:[#allocation2] sm:$0x1] %vm1310, %v1309
    %s1312 = sadd.s32 0, 0
    %s1313 = smul.u32 16, %s1312
    %p1314 = scmp.lt.s32.totalorder %s1313, 15
    %s1315 = scalar_select %p1314, %s1313, 15
    %s1316 = smul.addr %s1315, 8
    %s1317 = scalar_lea.vmem %s3, %s1316
    %s1318 = sadd.s32 0, 0
    %p1319 = scmp.lt.s32.totalorder %s1318, 0
    %s1320 = scalar_select %p1319, %s1318, 0
    %s1321 = scalar_lea.vmem %s4, %s1320
    // Predicated region
    $region18: #{vector_quantizer_forward.1} parent=1 // pred_check
      _
    $region19: #{vector_quantizer_forward.1} parent=1 // pred_check_branch
      %1323 = sbr.rel (0) target = $region21
    $region20: #{vector_quantizer_forward.1} parent=1 // pred_region
      %s1324 = sadd.s32 0, 0
      %s1325 = smul.u32 16, %s1324
    $region21: #{vector_quantizer_forward.1} parent=1 // pred_fallthru
      _
    // Predicated region
    $region22: #{vector_quantizer_forward.1} parent=1 // pred_check
      _
    $region23: #{vector_quantizer_forward.1} parent=1 // pred_check_branch
      %1327 = sbr.rel (0) target = $region25
    $region24: #{vector_quantizer_forward.1} parent=1 // pred_region
      %s1328 = sadd.s32 0, 0
    $region25: #{vector_quantizer_forward.1} parent=1 // pred_fallthru
      _
    // Predicated region
    $region26: #{vector_quantizer_forward.1} parent=1 // pred_check
      _
    $region27: #{vector_quantizer_forward.1} parent=1 // pred_check_branch
      %1330 = sbr.rel (0) target = $region29
    $region28: #{vector_quantizer_forward.1} parent=1 // pred_region
      _
    $region29: #{vector_quantizer_forward.1} parent=1 // pred_fallthru
      _
    // Predicated region
    $region30: #{vector_quantizer_forward.1} parent=1 // pred_check
      _
    $region31: #{vector_quantizer_forward.1} parent=1 // pred_check_branch
      %1332 = sbr.rel (0) target = $region33
    $region32: #{vector_quantizer_forward.1} parent=1 // pred_region
      _
    $region33: #{vector_quantizer_forward.1} parent=1 // pred_fallthru
      _
    // Predicated region
    $region34: #{vector_quantizer_forward.1} parent=1 // pred_check
      _
    $region35: #{vector_quantizer_forward.1} parent=1 // pred_check_branch
      %1334 = sbr.rel (0) target = $region37
    $region36: #{vector_quantizer_forward.1} parent=1 // pred_region
      %s1336 = ssub.s32 16, 16
      %1337 = vsyncadd [#allocation3], %s1336
      %s1339 = sshll.u32 [#allocation2], 4
      %s1340 = int_to_ptr.vmem [resolvable:$true] %s1339
      %1342 = dma.vmem_to_hbm [thread:$0]  %s1340, 16, %s7, [#allocation3]
    $region37: #{vector_quantizer_forward.1} parent=1 // pred_fallthru
      _
    // Predicated region
    $region38: #{vector_quantizer_forward.1} parent=1 // pred_check
      _
    $region39: #{vector_quantizer_forward.1} parent=1 // pred_check_branch
      %1344 = sbr.rel (0) target = $region41
    $region40: #{vector_quantizer_forward.1} parent=1 // pred_region
      %s1345 = sadd.s32 0, 0
      %s1346 = smul.u32 16, %s1345
      %p1347 = scmp.lt.s32.totalorder %s1346, 15
      %s1348 = scalar_select %p1347, %s1346, 15
      %s1349 = smul.addr %s1348, 8
      %s1350 = scalar_lea.vmem %s3, %s1349
    $region41: #{vector_quantizer_forward.1} parent=1 // pred_fallthru
      _
    // Predicated region
    $region42: #{vector_quantizer_forward.1} parent=1 // pred_check
      _
    $region43: #{vector_quantizer_forward.1} parent=1 // pred_check_branch
      %1352 = sbr.rel (0) target = $region45
    $region44: #{vector_quantizer_forward.1} parent=1 // pred_region
      %s1353 = sadd.s32 0, 0
      %p1354 = scmp.lt.s32.totalorder %s1353, 0
      %s1355 = scalar_select %p1354, %s1353, 0
      %s1356 = scalar_lea.vmem %s4, %s1355
    $region45: #{vector_quantizer_forward.1} parent=1 // pred_fallthru
      _
    // Predicated region
    $region46: #{vector_quantizer_forward.1} parent=1 // pred_check
      _
    $region47: #{vector_quantizer_forward.1} parent=1 // pred_check_branch
      %1358 = sbr.rel (0) target = $region49
    $region48: #{vector_quantizer_forward.1} parent=1 // pred_region
      _
    $region49: #{vector_quantizer_forward.1} parent=1 // pred_fallthru
      _
    // Predicated region
    $region50: #{vector_quantizer_forward.1} parent=1 // pred_check
      _
    $region51: #{vector_quantizer_forward.1} parent=1 // pred_check_branch
      %1360 = sbr.rel (0) target = $region53
    $region52: #{vector_quantizer_forward.1} parent=1 // pred_region
      _
    $region53: #{vector_quantizer_forward.1} parent=1 // pred_fallthru
      _
    // Predicated region
    $region54: #{vector_quantizer_forward.1} parent=1 // pred_check
      _
    $region55: #{vector_quantizer_forward.1} parent=1 // pred_check_branch
      %1362 = sbr.rel (0) target = $region57
    $region56: #{vector_quantizer_forward.1} parent=1 // pred_region
      %1363 = dma.done [#allocation3], 16
    $region57: #{vector_quantizer_forward.1} parent=1 // pred_fallthru
      _
    %1364 = vsyncpa [#allocation3], 1

</llo_original>
